<compile_context>
chip_gen: v7x
topology: tpu7x:2x2x1
jax: 0.10.0
libtpu: 0.0.40
codegen_flags: <defaults>
</compile_context>

<pallas_src>
import numpy as np
import jax
import jax.numpy as jnp
from jax import lax
from jax.experimental import pallas as pl
from jax.experimental.pallas import tpu as pltpu

LRELU_SLOPE = 0.01   # nn.LeakyReLU() default
BN_EPS = 1e-5        # nn.BatchNorm2d default


# ------------------------------ in-kernel helpers --------------------------- #

def _lane_tile(row, reps):
    """Tile a (1, C) row to (1, reps*C) along lanes (replaces M=1 matmuls)."""
    if reps == 1:
        return row
    return jnp.concatenate([row] * reps, axis=1)


def _lane_group_sum(row, c, groups):
    """Per-channel sum of a (1, groups*c) row laid out channel-fastest.

    Uses log2(groups) XLU lane rotations when `groups` is a power of two
    (MXU-free), otherwise a short lane-slice sum.  Returns (1, c)."""
    if groups == 1:
        return row
    if groups & (groups - 1) == 0:
        shift = c
        while shift < groups * c:
            row = row + pltpu.roll(row, shift=shift, axis=1)
            shift *= 2
        return row[:, :c]
    acc = row[:, :c]
    for g in range(1, groups):
        acc = acc + row[:, g * c:(g + 1) * c]
    return acc


# ----------------------------- Pallas kernel ------------------------------- #

def _make_encoder_kernel(B, layer_dims, latent_dim):
    """layer_dims: per conv layer, static ints (H, W, Cin, Ho, Wo, Cout)."""
    num_conv = len(layer_dims)

    def kernel(*refs):
        pos = 0
        x_ref = refs[pos]; pos += 1
        conv_refs = []
        for _ in range(num_conv):
            conv_refs.append(refs[pos:pos + 3])
            pos += 3
        wh_ref, bh_ref, eps_ref = refs[pos:pos + 3]; pos += 3
        out_ref = refs[pos]; pos += 1
        act_refs = refs[pos:pos + num_conv]          # VMEM scratch per layer

        src = x_ref                                   # (B*H0, W0*C0) in VMEM
        for li, (H, W, Cin, Ho, Wo, Cout) in enumerate(layer_dims):
            w_ref, g_ref, bt_ref = conv_refs[li]
            BHo = B * Ho
            WC = W * Cin

            # --- kh taps via stride-2 sublane reads (no selector matmuls) ---
            r1 = src[pl.ds(0, BHo, 2), :]             # input row 2*oh      (kh=1)
            r2 = src[pl.ds(1, BHo, 2), :]             # input row 2*oh + 1  (kh=2)
            # row 2*oh - 1 (kh=0) = previous odd row; zero the H-padding rows
            # (oh == 0 of every image in the batch).
            r0 = jnp.concatenate(
                [jnp.zeros((1, WC), r2.dtype), r2[:BHo - 1, :]], axis=0)
            oh_idx = lax.broadcasted_iota(jnp.int32, (BHo, WC), 0)
            r0 = jnp.where((oh_idx % Ho) == 0, 0.0, r0)

            # --- whole conv = ONE fused bf16 MXU matmul (K = 3*W*Cin) -------
            im2col = jnp.concatenate([r0, r1, r2], axis=1).astype(jnp.bfloat16)
            acc = jnp.dot(im2col, w_ref[...],
                          preferred_element_type=jnp.float32)   # (B*Ho, Wo*Cout)

            # --- BatchNorm2d, training-mode batch stats, two-pass variance --
            inv_n = 1.0 / float(B * Ho * Wo)
            s1 = jnp.sum(acc, axis=0, keepdims=True)             # (1, Wo*Cout)
            mean_c = _lane_group_sum(s1, Cout, Wo) * inv_n        # (1, Cout)
            cen = acc - _lane_tile(mean_c, Wo)
            s2 = jnp.sum(cen * cen, axis=0, keepdims=True)
            var_c = _lane_group_sum(s2, Cout, Wo) * inv_n
            scale_c = g_ref[...] * lax.rsqrt(var_c + BN_EPS)      # gamma folded
            bias_c = bt_ref[...] - mean_c * scale_c
            y = acc * _lane_tile(scale_c, Wo) + _lane_tile(bias_c, Wo)
            y = jnp.where(y > 0, y, LRELU_SLOPE * y)              # LeakyReLU

            act_refs[li][...] = y                                 # stays in VMEM
            src = act_refs[li]

        # --- head: fc_mu & fc_var as ONE bf16 matmul + reparameterize -------
        _, _, _, Hl, Wl, Cl = layer_dims[-1]
        parts = [src[pl.ds(h, B, Hl), :] for h in range(Hl)]      # rows b*Hl + h
        feat = jnp.concatenate(parts, axis=1).astype(jnp.bfloat16)  # (B, Hl*Wl*Cl)
        mu_lv = jnp.dot(feat, wh_ref[...],
                        preferred_element_type=jnp.float32) + bh_ref[...]
        mu = mu_lv[:, :latent_dim]
        lv = mu_lv[:, latent_dim:]
        z = eps_ref[...] * jnp.exp(0.5 * lv) + mu
        out_ref[...] = jnp.concatenate([z, mu_lv], axis=1)        # [z | mu | lv]

    return kernel


# --------------------------- constant builders ------------------------------ #

def _col_placement(W, Wo):
    """P[kw, w, ow] = 1 iff input col w == 2*ow + kw - 1 (stride 2, pad 1)."""
    P = np.zeros((3, W, Wo), np.float32)
    for kw in range(3):
        for ow in range(Wo):
            w = 2 * ow + kw - 1
            if 0 <= w < W:
                P[kw, w, ow] = 1.0
    return P


# ------------------------------- wrapper ------------------------------------ #

def encoder_forward(x_nchw, params, eps):
    B, C, H, W = x_nchw.shape
    conv = params["conv"]
    L = eps.shape[1]

    # Input -> channels-last (B*H, W*C) layout (single small transpose).
    a0 = jnp.transpose(x_nchw, (0, 2, 3, 1)).reshape(B * H, W * C)
    a0 = a0.astype(jnp.float32)

    ops = [a0]
    layer_dims = []
    scratch = []
    for (wconv, _bias, g, bt) in conv:     # conv bias cancels in train-mode BN
        cout, cin = int(wconv.shape[0]), int(wconv.shape[1])
        assert H % 2 == 0 and W % 2 == 0, "kernel assumes even spatial dims"
        Ho, Wo = H // 2, W // 2
        # Lowered conv weights: fold kw taps + W padding + stride-2 AND the
        # three kh taps into ONE (3*W*Cin, Wo*Cout) bf16 matrix.
        P = _col_placement(W, Wo)                               # (3, W, Wo) 0/1
        wg = jnp.transpose(wconv, (2, 3, 1, 0))                 # (kh, kw, cin, cout)
        M = jnp.einsum("awo,haic->hwioc", jnp.asarray(P), wg)
        M = M.reshape(3 * W * cin, Wo * cout)
        ops += [M.astype(jnp.bfloat16),
                g.reshape(1, cout).astype(jnp.float32),
                bt.reshape(1, cout).astype(jnp.float32)]
        layer_dims.append((H, W, cin, Ho, Wo, cout))
        scratch.append(pltpu.VMEM((B * Ho, Wo * cout), jnp.float32))
        H, W, C = Ho, Wo, cout

    # Head: fc_mu / fc_var fused into one (H*W*C, 2L) matmul; weights permuted
    # at trace time to the channels-last (h, w, c) flatten order of the kernel.
    wcat = jnp.concatenate([params["w_mu"], params["w_var"]], axis=0)   # (2L, C*H*W)
    whead = jnp.transpose(wcat.reshape(2 * L, C, H, W), (2, 3, 1, 0))
    whead = whead.reshape(H * W * C, 2 * L)
    bhead = jnp.concatenate([params["b_mu"], params["b_var"]]).reshape(1, 2 * L)
    ops += [whead.astype(jnp.bfloat16), bhead.astype(jnp.float32),
            eps.astype(jnp.float32)]
    # TODO(synk): eps could be drawn in-kernel with pltpu.prng_random_bits; it is
    # taken as an input so the reparameterization stays deterministic / testable.

    kernel = _make_encoder_kernel(B, layer_dims, L)
    out = pl.pallas_call(
        kernel,
        out_shape=jax.ShapeDtypeStruct((B, 3 * L), jnp.float32),
        scratch_shapes=scratch,
        compiler_params=pltpu.CompilerParams(vmem_limit_bytes=32 * 1024 * 1024),
    )(*ops)
    # TODO(synk): for large batches add a batch-tile grid axis with
    # dimension_semantics=("parallel",) so v7x's second TensorCore is used; the
    # BN batch stats would then need a cross-tile reduction pass.
    return out[:, :L], out[:, L:2 * L], out[:, 2 * L:]


# -------------------------- pure-JAX reference ------------------------------ #

def reference_forward(x, params, eps):
    h = x
    for (w, b, g, bt) in params["conv"]:
        y = lax.conv_general_dilated(h, w, window_strides=(2, 2),
                                     padding=((1, 1), (1, 1)),
                                     dimension_numbers=("NCHW", "OIHW", "NCHW"))
        y = y + b.reshape(1, -1, 1, 1)
        mean = jnp.mean(y, axis=(0, 2, 3), keepdims=True)
        var = jnp.mean((y - mean) ** 2, axis=(0, 2, 3), keepdims=True)
        yn = (y - mean) / jnp.sqrt(var + BN_EPS)
        yn = yn * g.reshape(1, -1, 1, 1) + bt.reshape(1, -1, 1, 1)
        h = jnp.where(yn > 0, yn, LRELU_SLOPE * yn)
    feat = h.reshape(h.shape[0], -1)
    mu = feat @ params["w_mu"].T + params["b_mu"]
    lv = feat @ params["w_var"].T + params["b_var"]
    z = eps * jnp.exp(0.5 * lv) + mu
    return z, mu, lv


# --------------------------------- main ------------------------------------- #

if __name__ == "__main__":
    # Encoder(in_channels=[4,16,32], latent_dim=8, hidden_dims=[16,32,64])
    # Input 16x16 -> 8 -> 4 -> 2, so fc in_features = hidden_dims[-1]*4 = 256.
    in_channels = [4, 16, 32]
    hidden_dims = [16, 32, 64]
    latent_dim = 8
    B, H, W = 2, 16, 16

    key = jax.random.PRNGKey(0)
    key, kx, keps = jax.random.split(key, 3)
    x = jax.random.normal(kx, (B, in_channels[0], H, W), dtype=jnp.float32)
    eps = jax.random.normal(keps, (B, latent_dim), dtype=jnp.float32)  # reparam noise

    conv_params = []
    for idx, h_dim in enumerate(hidden_dims):
        key, k1, k2, k3, k4 = jax.random.split(key, 5)
        w = 0.05 * jax.random.normal(k1, (h_dim, in_channels[idx], 3, 3), jnp.float32)
        b = 0.01 * jax.random.normal(k2, (h_dim,), jnp.float32)
        gamma = 1.0 + 0.05 * jax.random.normal(k3, (h_dim,), jnp.float32)
        beta = 0.05 * jax.random.normal(k4, (h_dim,), jnp.float32)
        conv_params.append((w, b, gamma, beta))

    feat_dim = hidden_dims[-1] * 4
    key, k1, k2, k3, k4 = jax.random.split(key, 5)
    params = {
        "conv": conv_params,
        "w_mu": 0.05 * jax.random.normal(k1, (latent_dim, feat_dim), jnp.float32),
        "b_mu": 0.01 * jax.random.normal(k2, (latent_dim,), jnp.float32),
        "w_var": 0.05 * jax.random.normal(k3, (latent_dim, feat_dim), jnp.float32),
        "b_var": 0.01 * jax.random.normal(k4, (latent_dim,), jnp.float32),
    }

    fwd = jax.jit(encoder_forward)
    z, mu, log_var = fwd(x, params, eps)
    jax.block_until_ready((z, mu, log_var))

    # Sanity check against a pure-JAX reference (loose tol: bf16 MXU operands).
    z_r, mu_r, lv_r = reference_forward(x, params, eps)
    assert z.shape == (B, latent_dim) and mu.shape == (B, latent_dim) \
        and log_var.shape == (B, latent_dim)
    assert bool(jnp.all(jnp.isfinite(z)))
    assert jnp.allclose(mu, mu_r, rtol=5e-2, atol=5e-2)
    assert jnp.allclose(log_var, lv_r, rtol=5e-2, atol=5e-2)
    assert jnp.allclose(z, z_r, rtol=5e-2, atol=5e-2)

    print("KERNEL_OK")
</pallas_src>

<mosaic_0001>
module attributes {stable_mosaic.version = 11 : i64} {
  func.func @kernel(%arg0: memref<32x64xf32, #tpu.memory_space<vmem>>, %arg1: memref<192x128xbf16, #tpu.memory_space<vmem>>, %arg2: memref<1x16xf32, #tpu.memory_space<vmem>>, %arg3: memref<1x16xf32, #tpu.memory_space<vmem>>, %arg4: memref<384x128xbf16, #tpu.memory_space<vmem>>, %arg5: memref<1x32xf32, #tpu.memory_space<vmem>>, %arg6: memref<1x32xf32, #tpu.memory_space<vmem>>, %arg7: memref<384x128xbf16, #tpu.memory_space<vmem>>, %arg8: memref<1x64xf32, #tpu.memory_space<vmem>>, %arg9: memref<1x64xf32, #tpu.memory_space<vmem>>, %arg10: memref<256x16xbf16, #tpu.memory_space<vmem>>, %arg11: memref<1x16xf32, #tpu.memory_space<vmem>>, %arg12: memref<2x8xf32, #tpu.memory_space<vmem>>, %arg13: memref<2x24xf32, #tpu.memory_space<vmem>>, %arg14: memref<16x128xf32, #tpu.memory_space<vmem>>, %arg15: memref<8x128xf32, #tpu.memory_space<vmem>>, %arg16: memref<4x128xf32, #tpu.memory_space<vmem>>) attributes {dimension_semantics = [], scalar_prefetch = 0 : i64, scratch_operands = 3 : i64, tpu.core_type = #tpu.core_type<tc>} {
    %c0 = arith.constant 0 : index
    %c0_0 = arith.constant 0 : index
    %0 = tpu.strided_load %arg0[%c0, %c0_0] {strides = array<i32: 2, 1>} : memref<32x64xf32, #tpu.memory_space<vmem>>, vector<16x64xf32>
    %c1 = arith.constant 1 : index
    %c0_1 = arith.constant 0 : index
    %1 = tpu.strided_load %arg0[%c1, %c0_1] {strides = array<i32: 2, 1>} : memref<32x64xf32, #tpu.memory_space<vmem>>, vector<16x64xf32>
    %cst = arith.constant 0.000000e+00 : f32
    %2 = vector.broadcast %cst : f32 to vector<1x64xf32>
    %3 = vector.extract_strided_slice %1 {offsets = [0, 0], sizes = [15, 64], strides = [1, 1]} : vector<16x64xf32> to vector<15x64xf32>
    %4 = tpu.concatenate %2, %3 in 0 : vector<1x64xf32>, vector<15x64xf32> -> vector<16x64xf32>
    %5 = tpu.iota {dimensions = array<i32: 0>} : vector<16x64xi32>
    %c8_i32 = arith.constant 8 : i32
    %c0_i32 = arith.constant 0 : i32
    %6 = arith.cmpi eq, %c8_i32, %c0_i32 : i32
    %c1_i32 = arith.constant 1 : i32
    %7 = arith.select %6, %c1_i32, %c8_i32 : i32
    %8 = vector.broadcast %7 : i32 to vector<16x64xi32>
    %9 = arith.remsi %5, %8 : vector<16x64xi32>
    %c0_i32_2 = arith.constant 0 : i32
    %10 = vector.broadcast %c0_i32_2 : i32 to vector<16x64xi32>
    %11 = arith.cmpi ne, %9, %10 : vector<16x64xi32>
    %c0_i32_3 = arith.constant 0 : i32
    %12 = vector.broadcast %c0_i32_3 : i32 to vector<16x64xi32>
    %13 = arith.cmpi slt, %9, %12 : vector<16x64xi32>
    %c0_i32_4 = arith.constant 0 : i32
    %14 = arith.cmpi slt, %7, %c0_i32_4 : i32
    %15 = vector.broadcast %14 : i1 to vector<16x64xi1>
    %16 = vector.broadcast %15 : vector<16x64xi1> to vector<16x64xi1>
    %17 = arith.xori %13, %16 : vector<16x64xi1>
    %18 = arith.andi %17, %11 : vector<16x64xi1>
    %19 = vector.broadcast %7 : i32 to vector<16x64xi32>
    %20 = arith.addi %9, %19 : vector<16x64xi32>
    %21 = arith.select %18, %20, %9 : vector<16x64xi1>, vector<16x64xi32>
    %c0_i32_5 = arith.constant 0 : i32
    %22 = vector.broadcast %c0_i32_5 : i32 to vector<16x64xi32>
    %23 = arith.cmpi eq, %21, %22 : vector<16x64xi32>
    %cst_6 = arith.constant 0.000000e+00 : f32
    %24 = vector.broadcast %cst_6 : f32 to vector<16x64xf32>
    %25 = arith.select %23, %24, %4 : vector<16x64xi1>, vector<16x64xf32>
    %26 = tpu.concatenate %25, %0, %1 in 1 : vector<16x64xf32>, vector<16x64xf32>, vector<16x64xf32> -> vector<16x192xf32>
    %27 = arith.truncf %26 : vector<16x192xf32> to vector<16x192xbf16>
    %c0_7 = arith.constant 0 : index
    %c0_8 = arith.constant 0 : index
    %28 = vector.load %arg1[%c0_7, %c0_8] : memref<192x128xbf16, #tpu.memory_space<vmem>>, vector<192x128xbf16>
    %cst_9 = arith.constant dense<0.000000e+00> : vector<16x128xf32>
    %29 = tpu.matmul %27, %28, %cst_9 {dimension_numbers = #tpu.dot_dimension_numbers<[1], [0], [0], [1], [0, 0, 1, 1], [], []>} : vector<16x192xbf16>, vector<192x128xbf16>, vector<16x128xf32> -> vector<16x128xf32>
    %cst_10 = arith.constant dense<0.000000e+00> : vector<128xf32>
    %30 = vector.multi_reduction <add>, %29, %cst_10 [0] : vector<16x128xf32> to vector<128xf32>
    %31 = vector.shape_cast %30 : vector<128xf32> to vector<1x128xf32>
    %c16_i32 = arith.constant 16 : i32
    %32 = tpu.dynamic_rotate %31 by %c16_i32 dim 1 : vector<1x128xf32>, i32 -> vector<1x128xf32>
    %33 = arith.addf %31, %32 : vector<1x128xf32>
    %c32_i32 = arith.constant 32 : i32
    %34 = tpu.dynamic_rotate %33 by %c32_i32 dim 1 : vector<1x128xf32>, i32 -> vector<1x128xf32>
    %35 = arith.addf %33, %34 : vector<1x128xf32>
    %c64_i32 = arith.constant 64 : i32
    %36 = tpu.dynamic_rotate %35 by %c64_i32 dim 1 : vector<1x128xf32>, i32 -> vector<1x128xf32>
    %37 = arith.addf %35, %36 : vector<1x128xf32>
    %38 = vector.extract_strided_slice %37 {offsets = [0, 0], sizes = [1, 16], strides = [1, 1]} : vector<1x128xf32> to vector<1x16xf32>
    %cst_11 = arith.constant 7.812500e-03 : f32
    %39 = vector.broadcast %cst_11 : f32 to vector<1x16xf32>
    %40 = arith.mulf %38, %39 : vector<1x16xf32>
    %41 = tpu.concatenate %40, %40, %40, %40, %40, %40, %40, %40 in 1 : vector<1x16xf32>, vector<1x16xf32>, vector<1x16xf32>, vector<1x16xf32>, vector<1x16xf32>, vector<1x16xf32>, vector<1x16xf32>, vector<1x16xf32> -> vector<1x128xf32>
    %42 = vector.broadcast %41 : vector<1x128xf32> to vector<16x128xf32>
    %43 = arith.subf %29, %42 : vector<16x128xf32>
    %44 = arith.mulf %43, %43 : vector<16x128xf32>
    %cst_12 = arith.constant dense<0.000000e+00> : vector<128xf32>
    %45 = vector.multi_reduction <add>, %44, %cst_12 [0] : vector<16x128xf32> to vector<128xf32>
    %46 = vector.shape_cast %45 : vector<128xf32> to vector<1x128xf32>
    %c16_i32_13 = arith.constant 16 : i32
    %47 = tpu.dynamic_rotate %46 by %c16_i32_13 dim 1 : vector<1x128xf32>, i32 -> vector<1x128xf32>
    %48 = arith.addf %46, %47 : vector<1x128xf32>
    %c32_i32_14 = arith.constant 32 : i32
    %49 = tpu.dynamic_rotate %48 by %c32_i32_14 dim 1 : vector<1x128xf32>, i32 -> vector<1x128xf32>
    %50 = arith.addf %48, %49 : vector<1x128xf32>
    %c64_i32_15 = arith.constant 64 : i32
    %51 = tpu.dynamic_rotate %50 by %c64_i32_15 dim 1 : vector<1x128xf32>, i32 -> vector<1x128xf32>
    %52 = arith.addf %50, %51 : vector<1x128xf32>
    %53 = vector.extract_strided_slice %52 {offsets = [0, 0], sizes = [1, 16], strides = [1, 1]} : vector<1x128xf32> to vector<1x16xf32>
    %cst_16 = arith.constant 7.812500e-03 : f32
    %54 = vector.broadcast %cst_16 : f32 to vector<1x16xf32>
    %55 = arith.mulf %53, %54 : vector<1x16xf32>
    %c0_17 = arith.constant 0 : index
    %c0_18 = arith.constant 0 : index
    %56 = vector.load %arg2[%c0_17, %c0_18] : memref<1x16xf32, #tpu.memory_space<vmem>>, vector<1x16xf32>
    %cst_19 = arith.constant 9.99999974E-6 : f32
    %57 = vector.broadcast %cst_19 : f32 to vector<1x16xf32>
    %58 = arith.addf %55, %57 : vector<1x16xf32>
    %59 = math.rsqrt %58 : vector<1x16xf32>
    %60 = arith.mulf %56, %59 : vector<1x16xf32>
    %c0_20 = arith.constant 0 : index
    %c0_21 = arith.constant 0 : index
    %61 = vector.load %arg3[%c0_20, %c0_21] : memref<1x16xf32, #tpu.memory_space<vmem>>, vector<1x16xf32>
    %62 = arith.mulf %40, %60 : vector<1x16xf32>
    %63 = arith.subf %61, %62 : vector<1x16xf32>
    %64 = tpu.concatenate %60, %60, %60, %60, %60, %60, %60, %60 in 1 : vector<1x16xf32>, vector<1x16xf32>, vector<1x16xf32>, vector<1x16xf32>, vector<1x16xf32>, vector<1x16xf32>, vector<1x16xf32>, vector<1x16xf32> -> vector<1x128xf32>
    %65 = vector.broadcast %64 : vector<1x128xf32> to vector<16x128xf32>
    %66 = arith.mulf %29, %65 : vector<16x128xf32>
    %67 = tpu.concatenate %63, %63, %63, %63, %63, %63, %63, %63 in 1 : vector<1x16xf32>, vector<1x16xf32>, vector<1x16xf32>, vector<1x16xf32>, vector<1x16xf32>, vector<1x16xf32>, vector<1x16xf32>, vector<1x16xf32> -> vector<1x128xf32>
    %68 = vector.broadcast %67 : vector<1x128xf32> to vector<16x128xf32>
    %69 = arith.addf %66, %68 : vector<16x128xf32>
    %cst_22 = arith.constant 0.000000e+00 : f32
    %70 = vector.broadcast %cst_22 : f32 to vector<16x128xf32>
    %71 = arith.cmpf ogt, %69, %70 : vector<16x128xf32>
    %cst_23 = arith.constant 0.00999999977 : f32
    %72 = vector.broadcast %cst_23 : f32 to vector<16x128xf32>
    %73 = arith.mulf %72, %69 : vector<16x128xf32>
    %74 = arith.select %71, %69, %73 : vector<16x128xi1>, vector<16x128xf32>
    %c0_24 = arith.constant 0 : index
    %c0_25 = arith.constant 0 : index
    %75 = vector.load %arg14[%c0_24, %c0_25] : memref<16x128xf32, #tpu.memory_space<vmem>>, vector<16x128xf32>
    tpu.vector_store %arg14[%c0_24, %c0_25], %74 {strides = array<i32>} : memref<16x128xf32, #tpu.memory_space<vmem>>, vector<16x128xf32>,
    %c0_26 = arith.constant 0 : index
    %c0_27 = arith.constant 0 : index
    %76 = tpu.strided_load %arg14[%c0_26, %c0_27] {strides = array<i32: 2, 1>} : memref<16x128xf32, #tpu.memory_space<vmem>>, vector<8x128xf32>
    %c1_28 = arith.constant 1 : index
    %c0_29 = arith.constant 0 : index
    %77 = tpu.strided_load %arg14[%c1_28, %c0_29] {strides = array<i32: 2, 1>} : memref<16x128xf32, #tpu.memory_space<vmem>>, vector<8x128xf32>
    %cst_30 = arith.constant 0.000000e+00 : f32
    %78 = vector.broadcast %cst_30 : f32 to vector<1x128xf32>
    %79 = vector.extract_strided_slice %77 {offsets = [0, 0], sizes = [7, 128], strides = [1, 1]} : vector<8x128xf32> to vector<7x128xf32>
    %80 = tpu.concatenate %78, %79 in 0 : vector<1x128xf32>, vector<7x128xf32> -> vector<8x128xf32>
    %81 = tpu.iota {dimensions = array<i32: 0>} : vector<8x128xi32>
    %c4_i32 = arith.constant 4 : i32
    %c0_i32_31 = arith.constant 0 : i32
    %82 = arith.cmpi eq, %c4_i32, %c0_i32_31 : i32
    %c1_i32_32 = arith.constant 1 : i32
    %83 = arith.select %82, %c1_i32_32, %c4_i32 : i32
    %84 = vector.broadcast %83 : i32 to vector<8x128xi32>
    %85 = arith.remsi %81, %84 : vector<8x128xi32>
    %c0_i32_33 = arith.constant 0 : i32
    %86 = vector.broadcast %c0_i32_33 : i32 to vector<8x128xi32>
    %87 = arith.cmpi ne, %85, %86 : vector<8x128xi32>
    %c0_i32_34 = arith.constant 0 : i32
    %88 = vector.broadcast %c0_i32_34 : i32 to vector<8x128xi32>
    %89 = arith.cmpi slt, %85, %88 : vector<8x128xi32>
    %c0_i32_35 = arith.constant 0 : i32
    %90 = arith.cmpi slt, %83, %c0_i32_35 : i32
    %91 = vector.broadcast %90 : i1 to vector<8x128xi1>
    %92 = vector.broadcast %91 : vector<8x128xi1> to vector<8x128xi1>
    %93 = arith.xori %89, %92 : vector<8x128xi1>
    %94 = arith.andi %93, %87 : vector<8x128xi1>
    %95 = vector.broadcast %83 : i32 to vector<8x128xi32>
    %96 = arith.addi %85, %95 : vector<8x128xi32>
    %97 = arith.select %94, %96, %85 : vector<8x128xi1>, vector<8x128xi32>
    %c0_i32_36 = arith.constant 0 : i32
    %98 = vector.broadcast %c0_i32_36 : i32 to vector<8x128xi32>
    %99 = arith.cmpi eq, %97, %98 : vector<8x128xi32>
    %cst_37 = arith.constant 0.000000e+00 : f32
    %100 = vector.broadcast %cst_37 : f32 to vector<8x128xf32>
    %101 = arith.select %99, %100, %80 : vector<8x128xi1>, vector<8x128xf32>
    %102 = tpu.concatenate %101, %76, %77 in 1 : vector<8x128xf32>, vector<8x128xf32>, vector<8x128xf32> -> vector<8x384xf32>
    %103 = arith.truncf %102 : vector<8x384xf32> to vector<8x384xbf16>
    %c0_38 = arith.constant 0 : index
    %c0_39 = arith.constant 0 : index
    %104 = vector.load %arg4[%c0_38, %c0_39] : memref<384x128xbf16, #tpu.memory_space<vmem>>, vector<384x128xbf16>
    %cst_40 = arith.constant dense<0.000000e+00> : vector<8x128xf32>
    %105 = tpu.matmul %103, %104, %cst_40 {dimension_numbers = #tpu.dot_dimension_numbers<[1], [0], [0], [1], [0, 0, 1, 1], [], []>} : vector<8x384xbf16>, vector<384x128xbf16>, vector<8x128xf32> -> vector<8x128xf32>
    %cst_41 = arith.constant dense<0.000000e+00> : vector<128xf32>
    %106 = vector.multi_reduction <add>, %105, %cst_41 [0] : vector<8x128xf32> to vector<128xf32>
    %107 = vector.shape_cast %106 : vector<128xf32> to vector<1x128xf32>
    %c32_i32_42 = arith.constant 32 : i32
    %108 = tpu.dynamic_rotate %107 by %c32_i32_42 dim 1 : vector<1x128xf32>, i32 -> vector<1x128xf32>
    %109 = arith.addf %107, %108 : vector<1x128xf32>
    %c64_i32_43 = arith.constant 64 : i32
    %110 = tpu.dynamic_rotate %109 by %c64_i32_43 dim 1 : vector<1x128xf32>, i32 -> vector<1x128xf32>
    %111 = arith.addf %109, %110 : vector<1x128xf32>
    %112 = vector.extract_strided_slice %111 {offsets = [0, 0], sizes = [1, 32], strides = [1, 1]} : vector<1x128xf32> to vector<1x32xf32>
    %cst_44 = arith.constant 3.125000e-02 : f32
    %113 = vector.broadcast %cst_44 : f32 to vector<1x32xf32>
    %114 = arith.mulf %112, %113 : vector<1x32xf32>
    %115 = tpu.concatenate %114, %114, %114, %114 in 1 : vector<1x32xf32>, vector<1x32xf32>, vector<1x32xf32>, vector<1x32xf32> -> vector<1x128xf32>
    %116 = vector.broadcast %115 : vector<1x128xf32> to vector<8x128xf32>
    %117 = arith.subf %105, %116 : vector<8x128xf32>
    %118 = arith.mulf %117, %117 : vector<8x128xf32>
    %cst_45 = arith.constant dense<0.000000e+00> : vector<128xf32>
    %119 = vector.multi_reduction <add>, %118, %cst_45 [0] : vector<8x128xf32> to vector<128xf32>
    %120 = vector.shape_cast %119 : vector<128xf32> to vector<1x128xf32>
    %c32_i32_46 = arith.constant 32 : i32
    %121 = tpu.dynamic_rotate %120 by %c32_i32_46 dim 1 : vector<1x128xf32>, i32 -> vector<1x128xf32>
    %122 = arith.addf %120, %121 : vector<1x128xf32>
    %c64_i32_47 = arith.constant 64 : i32
    %123 = tpu.dynamic_rotate %122 by %c64_i32_47 dim 1 : vector<1x128xf32>, i32 -> vector<1x128xf32>
    %124 = arith.addf %122, %123 : vector<1x128xf32>
    %125 = vector.extract_strided_slice %124 {offsets = [0, 0], sizes = [1, 32], strides = [1, 1]} : vector<1x128xf32> to vector<1x32xf32>
    %cst_48 = arith.constant 3.125000e-02 : f32
    %126 = vector.broadcast %cst_48 : f32 to vector<1x32xf32>
    %127 = arith.mulf %125, %126 : vector<1x32xf32>
    %c0_49 = arith.constant 0 : index
    %c0_50 = arith.constant 0 : index
    %128 = vector.load %arg5[%c0_49, %c0_50] : memref<1x32xf32, #tpu.memory_space<vmem>>, vector<1x32xf32>
    %cst_51 = arith.constant 9.99999974E-6 : f32
    %129 = vector.broadcast %cst_51 : f32 to vector<1x32xf32>
    %130 = arith.addf %127, %129 : vector<1x32xf32>
    %131 = math.rsqrt %130 : vector<1x32xf32>
    %132 = arith.mulf %128, %131 : vector<1x32xf32>
    %c0_52 = arith.constant 0 : index
    %c0_53 = arith.constant 0 : index
    %133 = vector.load %arg6[%c0_52, %c0_53] : memref<1x32xf32, #tpu.memory_space<vmem>>, vector<1x32xf32>
    %134 = arith.mulf %114, %132 : vector<1x32xf32>
    %135 = arith.subf %133, %134 : vector<1x32xf32>
    %136 = tpu.concatenate %132, %132, %132, %132 in 1 : vector<1x32xf32>, vector<1x32xf32>, vector<1x32xf32>, vector<1x32xf32> -> vector<1x128xf32>
    %137 = vector.broadcast %136 : vector<1x128xf32> to vector<8x128xf32>
    %138 = arith.mulf %105, %137 : vector<8x128xf32>
    %139 = tpu.concatenate %135, %135, %135, %135 in 1 : vector<1x32xf32>, vector<1x32xf32>, vector<1x32xf32>, vector<1x32xf32> -> vector<1x128xf32>
    %140 = vector.broadcast %139 : vector<1x128xf32> to vector<8x128xf32>
    %141 = arith.addf %138, %140 : vector<8x128xf32>
    %cst_54 = arith.constant 0.000000e+00 : f32
    %142 = vector.broadcast %cst_54 : f32 to vector<8x128xf32>
    %143 = arith.cmpf ogt, %141, %142 : vector<8x128xf32>
    %cst_55 = arith.constant 0.00999999977 : f32
    %144 = vector.broadcast %cst_55 : f32 to vector<8x128xf32>
    %145 = arith.mulf %144, %141 : vector<8x128xf32>
    %146 = arith.select %143, %141, %145 : vector<8x128xi1>, vector<8x128xf32>
    %c0_56 = arith.constant 0 : index
    %c0_57 = arith.constant 0 : index
    %147 = vector.load %arg15[%c0_56, %c0_57] : memref<8x128xf32, #tpu.memory_space<vmem>>, vector<8x128xf32>
    tpu.vector_store %arg15[%c0_56, %c0_57], %146 {strides = array<i32>} : memref<8x128xf32, #tpu.memory_space<vmem>>, vector<8x128xf32>,
    %c0_58 = arith.constant 0 : index
    %c0_59 = arith.constant 0 : index
    %148 = tpu.strided_load %arg15[%c0_58, %c0_59] {strides = array<i32: 2, 1>} : memref<8x128xf32, #tpu.memory_space<vmem>>, vector<4x128xf32>
    %c1_60 = arith.constant 1 : index
    %c0_61 = arith.constant 0 : index
    %149 = tpu.strided_load %arg15[%c1_60, %c0_61] {strides = array<i32: 2, 1>} : memref<8x128xf32, #tpu.memory_space<vmem>>, vector<4x128xf32>
    %cst_62 = arith.constant 0.000000e+00 : f32
    %150 = vector.broadcast %cst_62 : f32 to vector<1x128xf32>
    %151 = vector.extract_strided_slice %149 {offsets = [0, 0], sizes = [3, 128], strides = [1, 1]} : vector<4x128xf32> to vector<3x128xf32>
    %152 = tpu.concatenate %150, %151 in 0 : vector<1x128xf32>, vector<3x128xf32> -> vector<4x128xf32>
    %153 = tpu.iota {dimensions = array<i32: 0>} : vector<4x128xi32>
    %c2_i32 = arith.constant 2 : i32
    %c0_i32_63 = arith.constant 0 : i32
    %154 = arith.cmpi eq, %c2_i32, %c0_i32_63 : i32
    %c1_i32_64 = arith.constant 1 : i32
    %155 = arith.select %154, %c1_i32_64, %c2_i32 : i32
    %156 = vector.broadcast %155 : i32 to vector<4x128xi32>
    %157 = arith.remsi %153, %156 : vector<4x128xi32>
    %c0_i32_65 = arith.constant 0 : i32
    %158 = vector.broadcast %c0_i32_65 : i32 to vector<4x128xi32>
    %159 = arith.cmpi ne, %157, %158 : vector<4x128xi32>
    %c0_i32_66 = arith.constant 0 : i32
    %160 = vector.broadcast %c0_i32_66 : i32 to vector<4x128xi32>
    %161 = arith.cmpi slt, %157, %160 : vector<4x128xi32>
    %c0_i32_67 = arith.constant 0 : i32
    %162 = arith.cmpi slt, %155, %c0_i32_67 : i32
    %163 = vector.broadcast %162 : i1 to vector<4x128xi1>
    %164 = vector.broadcast %163 : vector<4x128xi1> to vector<4x128xi1>
    %165 = arith.xori %161, %164 : vector<4x128xi1>
    %166 = arith.andi %165, %159 : vector<4x128xi1>
    %167 = vector.broadcast %155 : i32 to vector<4x128xi32>
    %168 = arith.addi %157, %167 : vector<4x128xi32>
    %169 = arith.select %166, %168, %157 : vector<4x128xi1>, vector<4x128xi32>
    %c0_i32_68 = arith.constant 0 : i32
    %170 = vector.broadcast %c0_i32_68 : i32 to vector<4x128xi32>
    %171 = arith.cmpi eq, %169, %170 : vector<4x128xi32>
    %cst_69 = arith.constant 0.000000e+00 : f32
    %172 = vector.broadcast %cst_69 : f32 to vector<4x128xf32>
    %173 = arith.select %171, %172, %152 : vector<4x128xi1>, vector<4x128xf32>
    %174 = tpu.concatenate %173, %148, %149 in 1 : vector<4x128xf32>, vector<4x128xf32>, vector<4x128xf32> -> vector<4x384xf32>
    %175 = arith.truncf %174 : vector<4x384xf32> to vector<4x384xbf16>
    %c0_70 = arith.constant 0 : index
    %c0_71 = arith.constant 0 : index
    %176 = vector.load %arg7[%c0_70, %c0_71] : memref<384x128xbf16, #tpu.memory_space<vmem>>, vector<384x128xbf16>
    %cst_72 = arith.constant dense<0.000000e+00> : vector<4x128xf32>
    %177 = tpu.matmul %175, %176, %cst_72 {dimension_numbers = #tpu.dot_dimension_numbers<[1], [0], [0], [1], [0, 0, 1, 1], [], []>} : vector<4x384xbf16>, vector<384x128xbf16>, vector<4x128xf32> -> vector<4x128xf32>
    %cst_73 = arith.constant dense<0.000000e+00> : vector<128xf32>
    %178 = vector.multi_reduction <add>, %177, %cst_73 [0] : vector<4x128xf32> to vector<128xf32>
    %179 = vector.shape_cast %178 : vector<128xf32> to vector<1x128xf32>
    %c64_i32_74 = arith.constant 64 : i32
    %180 = tpu.dynamic_rotate %179 by %c64_i32_74 dim 1 : vector<1x128xf32>, i32 -> vector<1x128xf32>
    %181 = arith.addf %179, %180 : vector<1x128xf32>
    %182 = vector.extract_strided_slice %181 {offsets = [0, 0], sizes = [1, 64], strides = [1, 1]} : vector<1x128xf32> to vector<1x64xf32>
    %cst_75 = arith.constant 1.250000e-01 : f32
    %183 = vector.broadcast %cst_75 : f32 to vector<1x64xf32>
    %184 = arith.mulf %182, %183 : vector<1x64xf32>
    %185 = tpu.concatenate %184, %184 in 1 : vector<1x64xf32>, vector<1x64xf32> -> vector<1x128xf32>
    %186 = vector.broadcast %185 : vector<1x128xf32> to vector<4x128xf32>
    %187 = arith.subf %177, %186 : vector<4x128xf32>
    %188 = arith.mulf %187, %187 : vector<4x128xf32>
    %cst_76 = arith.constant dense<0.000000e+00> : vector<128xf32>
    %189 = vector.multi_reduction <add>, %188, %cst_76 [0] : vector<4x128xf32> to vector<128xf32>
    %190 = vector.shape_cast %189 : vector<128xf32> to vector<1x128xf32>
    %c64_i32_77 = arith.constant 64 : i32
    %191 = tpu.dynamic_rotate %190 by %c64_i32_77 dim 1 : vector<1x128xf32>, i32 -> vector<1x128xf32>
    %192 = arith.addf %190, %191 : vector<1x128xf32>
    %193 = vector.extract_strided_slice %192 {offsets = [0, 0], sizes = [1, 64], strides = [1, 1]} : vector<1x128xf32> to vector<1x64xf32>
    %cst_78 = arith.constant 1.250000e-01 : f32
    %194 = vector.broadcast %cst_78 : f32 to vector<1x64xf32>
    %195 = arith.mulf %193, %194 : vector<1x64xf32>
    %c0_79 = arith.constant 0 : index
    %c0_80 = arith.constant 0 : index
    %196 = vector.load %arg8[%c0_79, %c0_80] : memref<1x64xf32, #tpu.memory_space<vmem>>, vector<1x64xf32>
    %cst_81 = arith.constant 9.99999974E-6 : f32
    %197 = vector.broadcast %cst_81 : f32 to vector<1x64xf32>
    %198 = arith.addf %195, %197 : vector<1x64xf32>
    %199 = math.rsqrt %198 : vector<1x64xf32>
    %200 = arith.mulf %196, %199 : vector<1x64xf32>
    %c0_82 = arith.constant 0 : index
    %c0_83 = arith.constant 0 : index
    %201 = vector.load %arg9[%c0_82, %c0_83] : memref<1x64xf32, #tpu.memory_space<vmem>>, vector<1x64xf32>
    %202 = arith.mulf %184, %200 : vector<1x64xf32>
    %203 = arith.subf %201, %202 : vector<1x64xf32>
    %204 = tpu.concatenate %200, %200 in 1 : vector<1x64xf32>, vector<1x64xf32> -> vector<1x128xf32>
    %205 = vector.broadcast %204 : vector<1x128xf32> to vector<4x128xf32>
    %206 = arith.mulf %177, %205 : vector<4x128xf32>
    %207 = tpu.concatenate %203, %203 in 1 : vector<1x64xf32>, vector<1x64xf32> -> vector<1x128xf32>
    %208 = vector.broadcast %207 : vector<1x128xf32> to vector<4x128xf32>
    %209 = arith.addf %206, %208 : vector<4x128xf32>
    %cst_84 = arith.constant 0.000000e+00 : f32
    %210 = vector.broadcast %cst_84 : f32 to vector<4x128xf32>
    %211 = arith.cmpf ogt, %209, %210 : vector<4x128xf32>
    %cst_85 = arith.constant 0.00999999977 : f32
    %212 = vector.broadcast %cst_85 : f32 to vector<4x128xf32>
    %213 = arith.mulf %212, %209 : vector<4x128xf32>
    %214 = arith.select %211, %209, %213 : vector<4x128xi1>, vector<4x128xf32>
    %c0_86 = arith.constant 0 : index
    %c0_87 = arith.constant 0 : index
    %215 = vector.load %arg16[%c0_86, %c0_87] : memref<4x128xf32, #tpu.memory_space<vmem>>, vector<4x128xf32>
    tpu.vector_store %arg16[%c0_86, %c0_87], %214 {strides = array<i32>} : memref<4x128xf32, #tpu.memory_space<vmem>>, vector<4x128xf32>,
    %c0_88 = arith.constant 0 : index
    %c0_89 = arith.constant 0 : index
    %216 = tpu.strided_load %arg16[%c0_88, %c0_89] {strides = array<i32: 2, 1>} : memref<4x128xf32, #tpu.memory_space<vmem>>, vector<2x128xf32>
    %c1_90 = arith.constant 1 : index
    %c0_91 = arith.constant 0 : index
    %217 = tpu.strided_load %arg16[%c1_90, %c0_91] {strides = array<i32: 2, 1>} : memref<4x128xf32, #tpu.memory_space<vmem>>, vector<2x128xf32>
    %218 = tpu.concatenate %216, %217 in 1 : vector<2x128xf32>, vector<2x128xf32> -> vector<2x256xf32>
    %219 = arith.truncf %218 : vector<2x256xf32> to vector<2x256xbf16>
    %c0_92 = arith.constant 0 : index
    %c0_93 = arith.constant 0 : index
    %220 = vector.load %arg10[%c0_92, %c0_93] : memref<256x16xbf16, #tpu.memory_space<vmem>>, vector<256x16xbf16>
    %cst_94 = arith.constant dense<0.000000e+00> : vector<2x16xf32>
    %221 = tpu.matmul %219, %220, %cst_94 {dimension_numbers = #tpu.dot_dimension_numbers<[1], [0], [0], [1], [0, 0, 1, 1], [], []>} : vector<2x256xbf16>, vector<256x16xbf16>, vector<2x16xf32> -> vector<2x16xf32>
    %c0_95 = arith.constant 0 : index
    %c0_96 = arith.constant 0 : index
    %222 = vector.load %arg11[%c0_95, %c0_96] : memref<1x16xf32, #tpu.memory_space<vmem>>, vector<1x16xf32>
    %223 = vector.broadcast %222 : vector<1x16xf32> to vector<2x16xf32>
    %224 = arith.addf %221, %223 : vector<2x16xf32>
    %225 = vector.extract_strided_slice %224 {offsets = [0, 0], sizes = [2, 8], strides = [1, 1]} : vector<2x16xf32> to vector<2x8xf32>
    %226 = vector.extract_strided_slice %224 {offsets = [0, 8], sizes = [2, 8], strides = [1, 1]} : vector<2x16xf32> to vector<2x8xf32>
    %c0_97 = arith.constant 0 : index
    %c0_98 = arith.constant 0 : index
    %227 = vector.load %arg12[%c0_97, %c0_98] : memref<2x8xf32, #tpu.memory_space<vmem>>, vector<2x8xf32>
    %cst_99 = arith.constant 5.000000e-01 : f32
    %228 = vector.broadcast %cst_99 : f32 to vector<2x8xf32>
    %229 = arith.mulf %228, %226 : vector<2x8xf32>
    %230 = math.exp %229 : vector<2x8xf32>
    %231 = arith.mulf %227, %230 : vector<2x8xf32>
    %232 = arith.addf %231, %225 : vector<2x8xf32>
    %233 = tpu.concatenate %232, %224 in 1 : vector<2x8xf32>, vector<2x16xf32> -> vector<2x24xf32>
    %c0_100 = arith.constant 0 : index
    %c0_101 = arith.constant 0 : index
    %234 = vector.load %arg13[%c0_100, %c0_101] : memref<2x24xf32, #tpu.memory_space<vmem>>, vector<2x24xf32>
    tpu.vector_store %arg13[%c0_100, %c0_101], %233 {strides = array<i32>} : memref<2x24xf32, #tpu.memory_space<vmem>>, vector<2x24xf32>,
    return
  }
}

</mosaic_0001>

<llo_original>
// kernel: encoder_forward.1
$region0: #{encoder_forward.1}
  #allocation0 [shape = 'u32[]', space=smem, size = 0x4, offset = 0x4, fixed_abs, tag = 'smem constant byte address 0x4 - core index']
  #allocation1 [shape = 'u32[144,128]{1,0:T(1,128)}', space=vmem, size = 0x12000, scoped, tag = 'internal scratch']
  #allocation2 [shape = 'f32[16,128]{1,0:T(8,128)}', space=vmem, size = 0x2000, scoped, tag = 'scratch operand']
  #allocation3 [shape = 'f32[8,128]{1,0:T(8,128)}', space=vmem, size = 0x1000, scoped, tag = 'scratch operand']
  #allocation4 [shape = 'f32[4,128]{1,0:T(4,128)}', space=vmem, size = 0x800, scoped, tag = 'scratch operand']
  %s0 = inlined_call_operand.vmem [shape: f32[32,64], index: 0, kind: input, shape index: {}]
  %s1 = inlined_call_operand.vmem [shape: bf16[192,128], index: 1, kind: input, shape index: {}]
  %s2 = inlined_call_operand.vmem [shape: f32[1,16], index: 2, kind: input, shape index: {}]
  %s3 = inlined_call_operand.vmem [shape: f32[1,16], index: 3, kind: input, shape index: {}]
  %s4 = inlined_call_operand.vmem [shape: bf16[384,128], index: 4, kind: input, shape index: {}]
  %s5 = inlined_call_operand.vmem [shape: f32[1,32], index: 5, kind: input, shape index: {}]
  %s6 = inlined_call_operand.vmem [shape: f32[1,32], index: 6, kind: input, shape index: {}]
  %s7 = inlined_call_operand.vmem [shape: bf16[384,128], index: 7, kind: input, shape index: {}]
  %s8 = inlined_call_operand.vmem [shape: f32[1,64], index: 8, kind: input, shape index: {}]
  %s9 = inlined_call_operand.vmem [shape: f32[1,64], index: 9, kind: input, shape index: {}]
  %s10 = inlined_call_operand.vmem [shape: bf16[256,16], index: 10, kind: input, shape index: {}]
  %s11 = inlined_call_operand.vmem [shape: f32[1,16], index: 11, kind: input, shape index: {}]
  %s12 = inlined_call_operand.vmem [shape: f32[2,8], index: 12, kind: input, shape index: {}]
  %s13 = inlined_call_operand.vmem [shape: f32[2,24], index: 13, kind: output, shape index: {}]
  %s14 = sld [smem:[#allocation0]]
  $region62: #{encoder_forward.1} parent=0
    _
  %s16 = ssub.s32 1, %s14
  %s17 = scalar_select 0, %s16, %s14
  // Predicated region
  $region2: #{encoder_forward.1} parent=0 // pred_check
    _
  $region3: #{encoder_forward.1} parent=0 // pred_check_branch
    %19 = sbr.rel (0) target = $region5
  $region4: #{encoder_forward.1} parent=0 // pred_region
    _
  $region5: #{encoder_forward.1} parent=0 // pred_fallthru
    _
  // Predicated region
  $region6: #{encoder_forward.1} parent=0 // pred_check
    _
  $region7: #{encoder_forward.1} parent=0 // pred_check_branch
    %21 = sbr.rel (0) target = $region9
  $region8: #{encoder_forward.1} parent=0 // pred_region
    _
  $region9: #{encoder_forward.1} parent=0 // pred_fallthru
    _
  // Predicated region
  $region10: #{encoder_forward.1} parent=0 // pred_check
    _
  $region11: #{encoder_forward.1} parent=0 // pred_check_branch
    %23 = sbr.rel (0) target = $region13
  $region12: #{encoder_forward.1} parent=0 // pred_region
    _
  $region13: #{encoder_forward.1} parent=0 // pred_fallthru
    _
  // Predicated region
  $region14: #{encoder_forward.1} parent=0 // pred_check
    _
  $region15: #{encoder_forward.1} parent=0 // pred_check_branch
    %25 = sbr.rel (0) target = $region17
  $region16: #{encoder_forward.1} parent=0 // pred_region
    _
  $region17: #{encoder_forward.1} parent=0 // pred_fallthru
    _
  // Predicated region
  $region18: #{encoder_forward.1} parent=0 // pred_check
    _
  $region19: #{encoder_forward.1} parent=0 // pred_check_branch
    %27 = sbr.rel (0) target = $region21
  $region20: #{encoder_forward.1} parent=0 // pred_region
    _
  $region21: #{encoder_forward.1} parent=0 // pred_fallthru
    _
  // Predicated region
  $region22: #{encoder_forward.1} parent=0 // pred_check
    _
  $region23: #{encoder_forward.1} parent=0 // pred_check_branch
    %29 = sbr.rel (0) target = $region25
  $region24: #{encoder_forward.1} parent=0 // pred_region
    _
  $region25: #{encoder_forward.1} parent=0 // pred_fallthru
    _
  // Predicated region
  $region26: #{encoder_forward.1} parent=0 // pred_check
    _
  $region27: #{encoder_forward.1} parent=0 // pred_check_branch
    %31 = sbr.rel (0) target = $region29
  $region28: #{encoder_forward.1} parent=0 // pred_region
    _
  $region29: #{encoder_forward.1} parent=0 // pred_fallthru
    _
  // Predicated region
  $region30: #{encoder_forward.1} parent=0 // pred_check
    _
  $region31: #{encoder_forward.1} parent=0 // pred_check_branch
    %33 = sbr.rel (0) target = $region33
  $region32: #{encoder_forward.1} parent=0 // pred_region
    _
  $region33: #{encoder_forward.1} parent=0 // pred_fallthru
    _
  // Predicated region
  $region34: #{encoder_forward.1} parent=0 // pred_check
    _
  $region35: #{encoder_forward.1} parent=0 // pred_check_branch
    %35 = sbr.rel (0) target = $region37
  $region36: #{encoder_forward.1} parent=0 // pred_region
    _
  $region37: #{encoder_forward.1} parent=0 // pred_fallthru
    _
  // Predicated region
  $region38: #{encoder_forward.1} parent=0 // pred_check
    _
  $region39: #{encoder_forward.1} parent=0 // pred_check_branch
    %37 = sbr.rel (0) target = $region41
  $region40: #{encoder_forward.1} parent=0 // pred_region
    _
  $region41: #{encoder_forward.1} parent=0 // pred_fallthru
    _
  // Predicated region
  $region42: #{encoder_forward.1} parent=0 // pred_check
    _
  $region43: #{encoder_forward.1} parent=0 // pred_check_branch
    %39 = sbr.rel (0) target = $region45
  $region44: #{encoder_forward.1} parent=0 // pred_region
    _
  $region45: #{encoder_forward.1} parent=0 // pred_fallthru
    _
  // Predicated region
  $region46: #{encoder_forward.1} parent=0 // pred_check
    _
  $region47: #{encoder_forward.1} parent=0 // pred_check_branch
    %41 = sbr.rel (0) target = $region49
  $region48: #{encoder_forward.1} parent=0 // pred_region
    _
  $region49: #{encoder_forward.1} parent=0 // pred_fallthru
    _
  // Predicated region
  $region50: #{encoder_forward.1} parent=0 // pred_check
    _
  $region51: #{encoder_forward.1} parent=0 // pred_check_branch
    %43 = sbr.rel (0) target = $region53
  $region52: #{encoder_forward.1} parent=0 // pred_region
    _
  $region53: #{encoder_forward.1} parent=0 // pred_fallthru
    _
  %v45 = vld [vmem:[%s0] ss:$2 sm:$0xff]
  %s46 = scalar_lea.vmem %s0, 16
  %v47 = vld [vmem:[%s46] ss:$2 sm:$0xff]
  %s48 = scalar_lea.vmem %s0, 1
  %v49 = vld [vmem:[%s48] ss:$2 sm:$0xff]
  %s50 = scalar_lea.vmem %s0, 17
  %v51 = vld [vmem:[%s50] ss:$2 sm:$0xff]
  %vm54 = vcmask 1040384
  %v55 = vrot.slane %v49, 7
  %v56 = vrot.slane %v51, 7
  %v57 = vsel %vm54, %v55, %v56
  %v60 = vsel %vm54, 0.0, %v55
  %v61 = vlaneseq
  %v62 = vshrl.u32 %v61, 7
  %v63 = vadd.s32 %v62, 8
  %vm64 = vcmp.lt.s32.totalorder %v62, 0
  %v65 = vsub.s32 0, %v62
  %v66 = vsel %vm64, %v65, %v62
  %v67 = vshrl.u32 %v66, 3
  %v68 = vand.u32 %v66, 7
  %v69 = vsub.s32 0, %v68
  %v70 = vsel %vm64, %v69, %v68
  %vm71 = vcmp.lt.s32.totalorder %v63, 0
  %v72 = vsub.s32 0, %v63
  %v73 = vsel %vm71, %v72, %v63
  %v74 = vshrl.u32 %v73, 3
  %v75 = vand.u32 %v73, 7
  %v76 = vsub.s32 0, %v75
  %v77 = vsel %vm71, %v76, %v75
  %vm78 = vcmp.ne.s32.totalorder %v70, 0
  %vm79 = vcmp.ne.s32.totalorder %v77, 0
  %vm80 = vcmp.lt.s32.totalorder %v70, 0
  %vm81 = vcmp.lt.s32.totalorder %v77, 0
  %vm82 = vmand %vm80, %vm78
  %vm83 = vmand %vm81, %vm79
  %v84 = vadd.s32 %v70, 8
  %v85 = vadd.s32 %v77, 8
  %v86 = vsel %vm82, %v84, %v70
  %v87 = vsel %vm83, %v85, %v77
  %vm88 = vcmp.eq.s32.totalorder %v86, 0
  %vm89 = vcmp.eq.s32.totalorder %v87, 0
  %v90 = vsel %vm88, 0.0, %v60
  %v91 = vsel %vm89, 0.0, %v57
  %94 = vrot.lane.b32.xlu0 %v45, 64
  %v95 = vpop.permute.xlu0 %94
  %96 = vrot.lane.b32.xlu0 %v47, 64
  %v97 = vpop.permute.xlu0 %96
  %vm100 = vcmask 523264
  %v101 = vsel %vm100, %v90, %v95
  %v102 = vsel %vm100, %v91, %v97
  %v103 = vpack.c.bf16 %v102, %v101
  %v104 = vpack.c.bf16 %v51, %v49
  %v105 = vld [vmem:[%s1] sm:$0xf]
  %v106 = vld [vmem:[%s1 + $0x4] sm:$0xf]
  %v107 = vld [vmem:[%s1 + $0x8] sm:$0xf]
  %v108 = vld [vmem:[%s1 + $0xc] sm:$0xf]
  %v109 = vld [vmem:[%s1 + $0x10] sm:$0xf]
  %v110 = vld [vmem:[%s1 + $0x14] sm:$0xf]
  %v111 = vld [vmem:[%s1 + $0x18] sm:$0xf]
  %v112 = vld [vmem:[%s1 + $0x1c] sm:$0xf]
  %v113 = vld [vmem:[%s1 + $0x20] sm:$0xf]
  %v114 = vld [vmem:[%s1 + $0x24] sm:$0xf]
  %v115 = vld [vmem:[%s1 + $0x28] sm:$0xf]
  %v116 = vld [vmem:[%s1 + $0x2c] sm:$0xf]
  %v117 = vld [vmem:[%s1 + $0x30] sm:$0xf]
  %v118 = vld [vmem:[%s1 + $0x34] sm:$0xf]
  %v119 = vld [vmem:[%s1 + $0x38] sm:$0xf]
  %v120 = vld [vmem:[%s1 + $0x3c] sm:$0xf]
  %v121 = vld [vmem:[%s1 + $0x40] sm:$0xf]
  %v122 = vld [vmem:[%s1 + $0x44] sm:$0xf]
  %v123 = vld [vmem:[%s1 + $0x48] sm:$0xf]
  %v124 = vld [vmem:[%s1 + $0x4c] sm:$0xf]
  %v125 = vld [vmem:[%s1 + $0x50] sm:$0xf]
  %v126 = vld [vmem:[%s1 + $0x54] sm:$0xf]
  %v127 = vld [vmem:[%s1 + $0x58] sm:$0xf]
  %v128 = vld [vmem:[%s1 + $0x5c] sm:$0xf]
  %v153 = vunpack.c.l.b16 %v105
  %v154 = vunpack.c.l.b16 %v106
  %v155 = vunpack.c.l.b16 %v107
  %v156 = vunpack.c.l.b16 %v108
  %v157 = vunpack.c.l.b16 %v109
  %v158 = vunpack.c.l.b16 %v110
  %v159 = vunpack.c.l.b16 %v111
  %v160 = vunpack.c.l.b16 %v112
  %v161 = vunpack.c.l.b16 %v113
  %v162 = vunpack.c.l.b16 %v114
  %v163 = vunpack.c.l.b16 %v115
  %v164 = vunpack.c.l.b16 %v116
  %v165 = vunpack.c.l.b16 %v117
  %v166 = vunpack.c.l.b16 %v118
  %v167 = vunpack.c.l.b16 %v119
  %v168 = vunpack.c.l.b16 %v120
  %v169 = vunpack.c.l.b16 %v121
  %v170 = vunpack.c.l.b16 %v122
  %v171 = vunpack.c.l.b16 %v123
  %v172 = vunpack.c.l.b16 %v124
  %v173 = vunpack.c.l.b16 %v125
  %v174 = vunpack.c.l.b16 %v126
  %v175 = vunpack.c.l.b16 %v127
  %v176 = vunpack.c.l.b16 %v128
  %v177 = vpack.c.b16 %v154, %v153
  %v178 = vpack.c.b16 %v156, %v155
  %v179 = vpack.c.b16 %v158, %v157
  %v180 = vpack.c.b16 %v160, %v159
  %v181 = vpack.c.b16 %v162, %v161
  %v182 = vpack.c.b16 %v164, %v163
  %v183 = vpack.c.b16 %v166, %v165
  %v184 = vpack.c.b16 %v168, %v167
  %v185 = vpack.c.b16 %v170, %v169
  %v186 = vpack.c.b16 %v172, %v171
  %v187 = vpack.c.b16 %v174, %v173
  %v188 = vpack.c.b16 %v176, %v175
  %v202 = vsel %vm100, %v104, 0
  %204 = vmatprep.subr.bf16.mxu0 0
  %205 = vmatpush1.bf16.msra.mxu0 %v177
  %206 = vmatprep.subr.bf16.mxu0 0
  %207 = vmatpush1.bf16.msra.mxu0 %v178
  %208 = vmatprep.subr.bf16.mxu0 0
  %209 = vmatpush1.bf16.msra.mxu0 %v179
  %210 = vmatprep.subr.bf16.mxu0 0
  %211 = vmatpush1.bf16.msra.mxu0 %v180
  %212 = vmatprep.subr.bf16.mxu0 0
  %213 = vmatpush1.bf16.msra.mxu0 %v181
  %214 = vmatprep.subr.bf16.mxu0 0
  %215 = vmatpush1.bf16.msra.mxu0 %v182
  %216 = vmatprep.subr.bf16.mxu0 0
  %217 = vmatpush1.bf16.msra.mxu0 %v183
  %218 = vmatprep.subr.bf16.mxu0 0
  %219 = vmatpush1.bf16.msra.mxu0 %v184
  %220 = vmatprep.subr.bf16.mxu0 0
  %221 = vmatpush1.bf16.msra.mxu0 %v185
  %222 = vmatprep.subr.bf16.mxu0 0
  %223 = vmatpush1.bf16.msra.mxu0 %v186
  %224 = vmatprep.subr.bf16.mxu0 0
  %225 = vmatpush1.bf16.msra.mxu0 %v187
  %226 = vmatprep.subr.bf16.mxu0 0
  %227 = vmatpush1.bf16.msra.mxu0 %v188
  %228 = vmatprep.subr.bf16.mxu0 0
  %229 = vmatpush1.bf16.msra.mxu0 0
  %230 = vmatprep.subr.bf16.mxu0 0
  %231 = vmatpush1.bf16.msra.mxu0 0
  %232 = vmatprep.subr.bf16.mxu0 0
  %233 = vmatpush1.bf16.msra.mxu0 0
  %234 = vmatprep.subr.bf16.mxu0 0
  %235 = vmatpush1.bf16.msra.mxu0 0
  %236 = vmatprep.mubr.bf16.mxu0 %v202
  %237 = vmatmul.mubr.bf16.gmra.mrb[0].mxu0 %v103
  %v238 = vpop.f32.mrb[0].mxu0
  %v239 = vadd.f32 0.0, %v238
  %v240 = vpop.f32.mrb[0].mxu0
  %v241 = vpop.f32.mrb[0].mxu0
  %v242 = vadd.f32 0.0, %v241
  %v243 = vpop.f32.mrb[0].mxu0
  %244 = vdwg.mxu0
  %v245 = vadd.f32 %v239, %v242
  %v246 = vrot.slane %v245, 4
  %v247 = vadd.f32 %v245, %v246
  %v248 = vrot.slane %v247, 2
  %v249 = vadd.f32 %v247, %v248
  %v250 = vrot.slane %v249, 1
  %v251 = vadd.f32 %v249, %v250
  %252 = vrot.lane.b32.xlu0 %v251, 16
  %v253 = vpop.permute.xlu0 %252
  %v254 = vadd.f32 %v251, %v253
  %255 = vrot.lane.b32.xlu0 %v254, 32
  %v256 = vpop.permute.xlu0 %255
  %v257 = vadd.f32 %v254, %v256
  %258 = vrot.lane.b32.xlu0 %v257, 64
  %v259 = vpop.permute.xlu0 %258
  %v260 = vadd.f32 %v257, %v259
  %v261 = vmul.f32 %v260, 0.0078125
  %263 = vrot.lane.b32.xlu0 %v261, 16
  %v264 = vpop.permute.xlu0 %263
  %266 = vrot.lane.b32.xlu0 %v261, 32
  %v267 = vpop.permute.xlu0 %266
  %269 = vrot.lane.b32.xlu0 %v261, 48
  %v270 = vpop.permute.xlu0 %269
  %272 = vrot.lane.b32.xlu0 %v261, 64
  %v273 = vpop.permute.xlu0 %272
  %275 = vrot.lane.b32.xlu0 %v261, 80
  %v276 = vpop.permute.xlu0 %275
  %278 = vrot.lane.b32.xlu0 %v261, 96
  %v279 = vpop.permute.xlu0 %278
  %281 = vrot.lane.b32.xlu0 %v261, 112
  %v282 = vpop.permute.xlu0 %281
  %vm284 = vcmask 130048
  %v285 = vsel %vm284, %v261, %v264
  %vm286 = vcmask 261120
  %v287 = vsel %vm286, %v285, %v267
  %vm288 = vcmask 392192
  %v289 = vsel %vm288, %v287, %v270
  %v290 = vsel %vm100, %v289, %v273
  %vm291 = vcmask 654336
  %v292 = vsel %vm291, %v290, %v276
  %vm293 = vcmask 785408
  %v294 = vsel %vm293, %v292, %v279
  %vm295 = vcmask 916480
  %v296 = vsel %vm295, %v294, %v282
  %v297 = vlaneseq
  %v298 = vshrl.u32 %v297, 7
  %v299 = vsub.s32 0, %v298
  %v300 = vrot.slane %v296, %v299
  %v301 = vsub.f32 %v239, %v300
  %v302 = vsub.f32 %v242, %v300
  %v303 = vmul.f32 %v301, %v301
  %v304 = vmul.f32 %v302, %v302
  %v305 = vadd.f32 %v303, %v304
  %v306 = vrot.slane %v305, 4
  %v307 = vadd.f32 %v305, %v306
  %v308 = vrot.slane %v307, 2
  %v309 = vadd.f32 %v307, %v308
  %v310 = vrot.slane %v309, 1
  %v311 = vadd.f32 %v309, %v310
  %312 = vrot.lane.b32.xlu0 %v311, 16
  %v313 = vpop.permute.xlu0 %312
  %v314 = vadd.f32 %v311, %v313
  %315 = vrot.lane.b32.xlu0 %v314, 32
  %v316 = vpop.permute.xlu0 %315
  %v317 = vadd.f32 %v314, %v316
  %318 = vrot.lane.b32.xlu0 %v317, 64
  %v319 = vpop.permute.xlu0 %318
  %v320 = vadd.f32 %v317, %v319
  %v321 = vmul.f32 %v320, 0.0078125
  %v322 = vld [vmem:[%s2] sm:$0x1]
  %v323 = vadd.f32 %v321, 1e-05
  %v324 = vrsqrt.pop %v323
  %v325 = vmul.f32 %v322, %v324
  %v326 = vld [vmem:[%s3] sm:$0x1]
  %v327 = vmul.f32 %v261, %v325
  %v328 = vsub.f32 %v326, %v327
  %v330 = vlaneseq
  %v331 = vshrl.u32 %v330, 7
  %v332 = vsub.s32 0, %v331
  %v333 = vrot.slane %v325, %v332
  %334 = vrot.lane.b32.xlu0 %v333, 16
  %v335 = vpop.permute.xlu0 %334
  %337 = vrot.lane.b32.xlu0 %v333, 32
  %v338 = vpop.permute.xlu0 %337
  %340 = vrot.lane.b32.xlu0 %v333, 48
  %v341 = vpop.permute.xlu0 %340
  %343 = vrot.lane.b32.xlu0 %v333, 64
  %v344 = vpop.permute.xlu0 %343
  %346 = vrot.lane.b32.xlu0 %v333, 80
  %v347 = vpop.permute.xlu0 %346
  %349 = vrot.lane.b32.xlu0 %v333, 96
  %v350 = vpop.permute.xlu0 %349
  %352 = vrot.lane.b32.xlu0 %v333, 112
  %v353 = vpop.permute.xlu0 %352
  %v355 = vsel %vm284, %v325, %v335
  %v356 = vsel %vm286, %v355, %v338
  %v357 = vsel %vm288, %v356, %v341
  %v358 = vsel %vm100, %v357, %v344
  %v359 = vsel %vm291, %v358, %v347
  %v360 = vsel %vm293, %v359, %v350
  %v361 = vsel %vm295, %v360, %v353
  %v362 = vlaneseq
  %v363 = vshrl.u32 %v362, 7
  %v364 = vsub.s32 0, %v363
  %v365 = vrot.slane %v361, %v364
  %v366 = vmul.f32 %v239, %v365
  %v367 = vmul.f32 %v242, %v365
  %v369 = vlaneseq
  %v370 = vshrl.u32 %v369, 7
  %v371 = vsub.s32 0, %v370
  %v372 = vrot.slane %v328, %v371
  %373 = vrot.lane.b32.xlu0 %v372, 16
  %v374 = vpop.permute.xlu0 %373
  %376 = vrot.lane.b32.xlu0 %v372, 32
  %v377 = vpop.permute.xlu0 %376
  %379 = vrot.lane.b32.xlu0 %v372, 48
  %v380 = vpop.permute.xlu0 %379
  %382 = vrot.lane.b32.xlu0 %v372, 64
  %v383 = vpop.permute.xlu0 %382
  %385 = vrot.lane.b32.xlu0 %v372, 80
  %v386 = vpop.permute.xlu0 %385
  %388 = vrot.lane.b32.xlu0 %v372, 96
  %v389 = vpop.permute.xlu0 %388
  %391 = vrot.lane.b32.xlu0 %v372, 112
  %v392 = vpop.permute.xlu0 %391
  %v394 = vsel %vm284, %v328, %v374
  %v395 = vsel %vm286, %v394, %v377
  %v396 = vsel %vm288, %v395, %v380
  %v397 = vsel %vm100, %v396, %v383
  %v398 = vsel %vm291, %v397, %v386
  %v399 = vsel %vm293, %v398, %v389
  %v400 = vsel %vm295, %v399, %v392
  %v401 = vlaneseq
  %v402 = vshrl.u32 %v401, 7
  %v403 = vsub.s32 0, %v402
  %v404 = vrot.slane %v400, %v403
  %v405 = vadd.f32 %v366, %v404
  %v406 = vadd.f32 %v367, %v404
  %vm407 = vcmp.gt.f32.partialorder %v405, 0.0
  %vm408 = vcmp.gt.f32.partialorder %v406, 0.0
  %v409 = vmul.f32 %v405, 0.01
  %v410 = vmul.f32 %v406, 0.01
  %v411 = vsel %vm407, %v405, %v409
  %v412 = vsel %vm408, %v406, %v410
  %413 = vst [vmem:[#allocation2] sm:$0xff] %v411
  %414 = vst [vmem:[#allocation2 + $0x8] sm:$0xff] %v412
  %v415 = vld [vmem:[#allocation2] ss:$2 sm:$0xff]
  %s416 = scalar_lea.vmem [#allocation2], 1
  %v417 = vld [vmem:[%s416] ss:$2 sm:$0xff]
  %v419 = vrot.slane %v417, 7
  %v421 = vsel %vm54, 0.0, %v419
  %vm422 = vcmp.lt.s32.totalorder %v62, 0
  %v423 = vsub.s32 0, %v62
  %v424 = vsel %vm422, %v423, %v62
  %v425 = vshrl.u32 %v424, 2
  %v426 = vand.u32 %v424, 3
  %v427 = vsub.s32 0, %v426
  %v428 = vsel %vm422, %v427, %v426
  %vm429 = vcmp.ne.s32.totalorder %v428, 0
  %vm430 = vcmp.lt.s32.totalorder %v428, 0
  %vm431 = vmand %vm430, %vm429
  %v432 = vadd.s32 %v428, 4
  %v433 = vsel %vm431, %v432, %v428
  %vm434 = vcmp.eq.s32.totalorder %v433, 0
  %v435 = vsel %vm434, 0.0, %v421
  %v436 = vpack.c.bf16 %v435, %v435
  %v437 = vpack.c.bf16 %v415, %v415
  %v438 = vpack.c.bf16 %v417, %v417
  %v439 = vld [vmem:[%s4] sm:$0xf]
  %v440 = vld [vmem:[%s4 + $0x4] sm:$0xf]
  %v441 = vld [vmem:[%s4 + $0x8] sm:$0xf]
  %v442 = vld [vmem:[%s4 + $0xc] sm:$0xf]
  %v443 = vld [vmem:[%s4 + $0x10] sm:$0xf]
  %v444 = vld [vmem:[%s4 + $0x14] sm:$0xf]
  %v445 = vld [vmem:[%s4 + $0x18] sm:$0xf]
  %v446 = vld [vmem:[%s4 + $0x1c] sm:$0xf]
  %v447 = vld [vmem:[%s4 + $0x20] sm:$0xf]
  %v448 = vld [vmem:[%s4 + $0x24] sm:$0xf]
  %v449 = vld [vmem:[%s4 + $0x28] sm:$0xf]
  %v450 = vld [vmem:[%s4 + $0x2c] sm:$0xf]
  %v451 = vld [vmem:[%s4 + $0x30] sm:$0xf]
  %v452 = vld [vmem:[%s4 + $0x34] sm:$0xf]
  %v453 = vld [vmem:[%s4 + $0x38] sm:$0xf]
  %v454 = vld [vmem:[%s4 + $0x3c] sm:$0xf]
  %v455 = vld [vmem:[%s4 + $0x40] sm:$0xf]
  %v456 = vld [vmem:[%s4 + $0x44] sm:$0xf]
  %v457 = vld [vmem:[%s4 + $0x48] sm:$0xf]
  %v458 = vld [vmem:[%s4 + $0x4c] sm:$0xf]
  %v459 = vld [vmem:[%s4 + $0x50] sm:$0xf]
  %v460 = vld [vmem:[%s4 + $0x54] sm:$0xf]
  %v461 = vld [vmem:[%s4 + $0x58] sm:$0xf]
  %v462 = vld [vmem:[%s4 + $0x5c] sm:$0xf]
  %v463 = vld [vmem:[%s4 + $0x60] sm:$0xf]
  %v464 = vld [vmem:[%s4 + $0x64] sm:$0xf]
  %v465 = vld [vmem:[%s4 + $0x68] sm:$0xf]
  %v466 = vld [vmem:[%s4 + $0x6c] sm:$0xf]
  %v467 = vld [vmem:[%s4 + $0x70] sm:$0xf]
  %v468 = vld [vmem:[%s4 + $0x74] sm:$0xf]
  %v469 = vld [vmem:[%s4 + $0x78] sm:$0xf]
  %v470 = vld [vmem:[%s4 + $0x7c] sm:$0xf]
  %v471 = vld [vmem:[%s4 + $0x80] sm:$0xf]
  %v472 = vld [vmem:[%s4 + $0x84] sm:$0xf]
  %v473 = vld [vmem:[%s4 + $0x88] sm:$0xf]
  %v474 = vld [vmem:[%s4 + $0x8c] sm:$0xf]
  %v475 = vld [vmem:[%s4 + $0x90] sm:$0xf]
  %v476 = vld [vmem:[%s4 + $0x94] sm:$0xf]
  %v477 = vld [vmem:[%s4 + $0x98] sm:$0xf]
  %v478 = vld [vmem:[%s4 + $0x9c] sm:$0xf]
  %v479 = vld [vmem:[%s4 + $0xa0] sm:$0xf]
  %v480 = vld [vmem:[%s4 + $0xa4] sm:$0xf]
  %v481 = vld [vmem:[%s4 + $0xa8] sm:$0xf]
  %v482 = vld [vmem:[%s4 + $0xac] sm:$0xf]
  %v483 = vld [vmem:[%s4 + $0xb0] sm:$0xf]
  %v484 = vld [vmem:[%s4 + $0xb4] sm:$0xf]
  %v485 = vld [vmem:[%s4 + $0xb8] sm:$0xf]
  %v486 = vld [vmem:[%s4 + $0xbc] sm:$0xf]
  %v535 = vunpack.c.l.b16 %v439
  %v536 = vunpack.c.l.b16 %v440
  %v537 = vunpack.c.l.b16 %v441
  %v538 = vunpack.c.l.b16 %v442
  %v539 = vunpack.c.l.b16 %v443
  %v540 = vunpack.c.l.b16 %v444
  %v541 = vunpack.c.l.b16 %v445
  %v542 = vunpack.c.l.b16 %v446
  %v543 = vunpack.c.l.b16 %v447
  %v544 = vunpack.c.l.b16 %v448
  %v545 = vunpack.c.l.b16 %v449
  %v546 = vunpack.c.l.b16 %v450
  %v547 = vunpack.c.l.b16 %v451
  %v548 = vunpack.c.l.b16 %v452
  %v549 = vunpack.c.l.b16 %v453
  %v550 = vunpack.c.l.b16 %v454
  %v551 = vunpack.c.l.b16 %v455
  %v552 = vunpack.c.l.b16 %v456
  %v553 = vunpack.c.l.b16 %v457
  %v554 = vunpack.c.l.b16 %v458
  %v555 = vunpack.c.l.b16 %v459
  %v556 = vunpack.c.l.b16 %v460
  %v557 = vunpack.c.l.b16 %v461
  %v558 = vunpack.c.l.b16 %v462
  %v559 = vunpack.c.l.b16 %v463
  %v560 = vunpack.c.l.b16 %v464
  %v561 = vunpack.c.l.b16 %v465
  %v562 = vunpack.c.l.b16 %v466
  %v563 = vunpack.c.l.b16 %v467
  %v564 = vunpack.c.l.b16 %v468
  %v565 = vunpack.c.l.b16 %v469
  %v566 = vunpack.c.l.b16 %v470
  %v567 = vunpack.c.l.b16 %v471
  %v568 = vunpack.c.l.b16 %v472
  %v569 = vunpack.c.l.b16 %v473
  %v570 = vunpack.c.l.b16 %v474
  %v571 = vunpack.c.l.b16 %v475
  %v572 = vunpack.c.l.b16 %v476
  %v573 = vunpack.c.l.b16 %v477
  %v574 = vunpack.c.l.b16 %v478
  %v575 = vunpack.c.l.b16 %v479
  %v576 = vunpack.c.l.b16 %v480
  %v577 = vunpack.c.l.b16 %v481
  %v578 = vunpack.c.l.b16 %v482
  %v579 = vunpack.c.l.b16 %v483
  %v580 = vunpack.c.l.b16 %v484
  %v581 = vunpack.c.l.b16 %v485
  %v582 = vunpack.c.l.b16 %v486
  %v583 = vpack.c.b16 %v536, %v535
  %v584 = vpack.c.b16 %v538, %v537
  %v585 = vpack.c.b16 %v540, %v539
  %v586 = vpack.c.b16 %v542, %v541
  %v587 = vpack.c.b16 %v544, %v543
  %v588 = vpack.c.b16 %v546, %v545
  %v589 = vpack.c.b16 %v548, %v547
  %v590 = vpack.c.b16 %v550, %v549
  %v591 = vpack.c.b16 %v552, %v551
  %v592 = vpack.c.b16 %v554, %v553
  %v593 = vpack.c.b16 %v556, %v555
  %v594 = vpack.c.b16 %v558, %v557
  %v595 = vpack.c.b16 %v560, %v559
  %v596 = vpack.c.b16 %v562, %v561
  %v597 = vpack.c.b16 %v564, %v563
  %v598 = vpack.c.b16 %v566, %v565
  %v599 = vpack.c.b16 %v568, %v567
  %v600 = vpack.c.b16 %v570, %v569
  %v601 = vpack.c.b16 %v572, %v571
  %v602 = vpack.c.b16 %v574, %v573
  %v603 = vpack.c.b16 %v576, %v575
  %v604 = vpack.c.b16 %v578, %v577
  %v605 = vpack.c.b16 %v580, %v579
  %v606 = vpack.c.b16 %v582, %v581
  %631 = vmatprep.subr.bf16.mxu0 0
  %632 = vmatpush1.bf16.msra.mxu0 %v583
  %633 = vmatprep.subr.bf16.mxu0 0
  %634 = vmatpush1.bf16.msra.mxu0 %v584
  %635 = vmatprep.subr.bf16.mxu0 0
  %636 = vmatpush1.bf16.msra.mxu0 %v585
  %637 = vmatprep.subr.bf16.mxu0 0
  %638 = vmatpush1.bf16.msra.mxu0 %v586
  %639 = vmatprep.subr.bf16.mxu0 0
  %640 = vmatpush1.bf16.msra.mxu0 %v587
  %641 = vmatprep.subr.bf16.mxu0 0
  %642 = vmatpush1.bf16.msra.mxu0 %v588
  %643 = vmatprep.subr.bf16.mxu0 0
  %644 = vmatpush1.bf16.msra.mxu0 %v589
  %645 = vmatprep.subr.bf16.mxu0 0
  %646 = vmatpush1.bf16.msra.mxu0 %v590
  %647 = vmatprep.subr.bf16.mxu0 0
  %648 = vmatpush1.bf16.msra.mxu0 %v591
  %649 = vmatprep.subr.bf16.mxu0 0
  %650 = vmatpush1.bf16.msra.mxu0 %v592
  %651 = vmatprep.subr.bf16.mxu0 0
  %652 = vmatpush1.bf16.msra.mxu0 %v593
  %653 = vmatprep.subr.bf16.mxu0 0
  %654 = vmatpush1.bf16.msra.mxu0 %v594
  %655 = vmatprep.subr.bf16.mxu0 0
  %656 = vmatpush1.bf16.msra.mxu0 %v595
  %657 = vmatprep.subr.bf16.mxu0 0
  %658 = vmatpush1.bf16.msra.mxu0 %v596
  %659 = vmatprep.subr.bf16.mxu0 0
  %660 = vmatpush1.bf16.msra.mxu0 %v597
  %661 = vmatprep.subr.bf16.mxu0 0
  %662 = vmatpush1.bf16.msra.mxu0 %v598
  %663 = vmatprep.mubr.bf16.mxu0 %v437
  %664 = vmatmul.mubr.bf16.gmra.mrb[0].mxu0 %v436
  %v665 = vpop.f32.mrb[0].mxu0
  %v666 = vadd.f32 0.0, %v665
  %v667 = vpop.f32.mrb[0].mxu0
  %v668 = vpop.f32.mrb[0].mxu0
  %v669 = vpop.f32.mrb[0].mxu0
  %670 = vdwg.mxu0
  %671 = vmatprep.subr.bf16.mxu0 0
  %672 = vmatpush1.bf16.msra.mxu0 %v599
  %673 = vmatprep.subr.bf16.mxu0 0
  %674 = vmatpush1.bf16.msra.mxu0 %v600
  %675 = vmatprep.subr.bf16.mxu0 0
  %676 = vmatpush1.bf16.msra.mxu0 %v601
  %677 = vmatprep.subr.bf16.mxu0 0
  %678 = vmatpush1.bf16.msra.mxu0 %v602
  %679 = vmatprep.subr.bf16.mxu0 0
  %680 = vmatpush1.bf16.msra.mxu0 %v603
  %681 = vmatprep.subr.bf16.mxu0 0
  %682 = vmatpush1.bf16.msra.mxu0 %v604
  %683 = vmatprep.subr.bf16.mxu0 0
  %684 = vmatpush1.bf16.msra.mxu0 %v605
  %685 = vmatprep.subr.bf16.mxu0 0
  %686 = vmatpush1.bf16.msra.mxu0 %v606
  %687 = vmatprep.subr.bf16.mxu0 0
  %688 = vmatpush1.bf16.msra.mxu0 0
  %689 = vmatprep.subr.bf16.mxu0 0
  %690 = vmatpush1.bf16.msra.mxu0 0
  %691 = vmatprep.subr.bf16.mxu0 0
  %692 = vmatpush1.bf16.msra.mxu0 0
  %693 = vmatprep.subr.bf16.mxu0 0
  %694 = vmatpush1.bf16.msra.mxu0 0
  %695 = vmatprep.subr.bf16.mxu0 0
  %696 = vmatpush1.bf16.msra.mxu0 0
  %697 = vmatprep.subr.bf16.mxu0 0
  %698 = vmatpush1.bf16.msra.mxu0 0
  %699 = vmatprep.subr.bf16.mxu0 0
  %700 = vmatpush1.bf16.msra.mxu0 0
  %701 = vmatprep.subr.bf16.mxu0 0
  %702 = vmatpush1.bf16.msra.mxu0 0
  %703 = vmatprep.mubr.bf16.mxu0 0
  %704 = vmatmul.mubr.bf16.gmra.mrb[0].mxu0 %v438
  %v705 = vpop.f32.mrb[0].mxu0
  %v706 = vadd.f32 %v666, %v705
  %v707 = vpop.f32.mrb[0].mxu0
  %v708 = vpop.f32.mrb[0].mxu0
  %v709 = vpop.f32.mrb[0].mxu0
  %710 = vdwg.mxu0
  %v711 = vrot.slane %v706, 4
  %v712 = vadd.f32 %v706, %v711
  %v713 = vrot.slane %v712, 2
  %v714 = vadd.f32 %v712, %v713
  %v715 = vrot.slane %v714, 1
  %v716 = vadd.f32 %v714, %v715
  %717 = vrot.lane.b32.xlu0 %v716, 32
  %v718 = vpop.permute.xlu0 %717
  %v719 = vadd.f32 %v716, %v718
  %720 = vrot.lane.b32.xlu0 %v719, 64
  %v721 = vpop.permute.xlu0 %720
  %v722 = vadd.f32 %v719, %v721
  %v723 = vmul.f32 %v722, 0.03125
  %725 = vrot.lane.b32.xlu0 %v723, 32
  %v726 = vpop.permute.xlu0 %725
  %728 = vrot.lane.b32.xlu0 %v723, 64
  %v729 = vpop.permute.xlu0 %728
  %731 = vrot.lane.b32.xlu0 %v723, 96
  %v732 = vpop.permute.xlu0 %731
  %v734 = vsel %vm286, %v723, %v726
  %v735 = vsel %vm100, %v734, %v729
  %v736 = vsel %vm293, %v735, %v732
  %v737 = vlaneseq
  %v738 = vshrl.u32 %v737, 7
  %v739 = vsub.s32 0, %v738
  %v740 = vrot.slane %v736, %v739
  %v741 = vsub.f32 %v706, %v740
  %v742 = vmul.f32 %v741, %v741
  %v743 = vrot.slane %v742, 4
  %v744 = vadd.f32 %v742, %v743
  %v745 = vrot.slane %v744, 2
  %v746 = vadd.f32 %v744, %v745
  %v747 = vrot.slane %v746, 1
  %v748 = vadd.f32 %v746, %v747
  %749 = vrot.lane.b32.xlu0 %v748, 32
  %v750 = vpop.permute.xlu0 %749
  %v751 = vadd.f32 %v748, %v750
  %752 = vrot.lane.b32.xlu0 %v751, 64
  %v753 = vpop.permute.xlu0 %752
  %v754 = vadd.f32 %v751, %v753
  %v755 = vmul.f32 %v754, 0.03125
  %v756 = vld [vmem:[%s5] sm:$0x1]
  %v757 = vadd.f32 %v755, 1e-05
  %v758 = vrsqrt.pop %v757
  %v759 = vmul.f32 %v756, %v758
  %v760 = vld [vmem:[%s6] sm:$0x1]
  %v761 = vmul.f32 %v723, %v759
  %v762 = vsub.f32 %v760, %v761
  %v764 = vlaneseq
  %v765 = vshrl.u32 %v764, 7
  %v766 = vsub.s32 0, %v765
  %v767 = vrot.slane %v759, %v766
  %768 = vrot.lane.b32.xlu0 %v767, 32
  %v769 = vpop.permute.xlu0 %768
  %771 = vrot.lane.b32.xlu0 %v767, 64
  %v772 = vpop.permute.xlu0 %771
  %774 = vrot.lane.b32.xlu0 %v767, 96
  %v775 = vpop.permute.xlu0 %774
  %v777 = vsel %vm286, %v759, %v769
  %v778 = vsel %vm100, %v777, %v772
  %v779 = vsel %vm293, %v778, %v775
  %v780 = vlaneseq
  %v781 = vshrl.u32 %v780, 7
  %v782 = vsub.s32 0, %v781
  %v783 = vrot.slane %v779, %v782
  %v784 = vmul.f32 %v706, %v783
  %v786 = vlaneseq
  %v787 = vshrl.u32 %v786, 7
  %v788 = vsub.s32 0, %v787
  %v789 = vrot.slane %v762, %v788
  %790 = vrot.lane.b32.xlu0 %v789, 32
  %v791 = vpop.permute.xlu0 %790
  %793 = vrot.lane.b32.xlu0 %v789, 64
  %v794 = vpop.permute.xlu0 %793
  %796 = vrot.lane.b32.xlu0 %v789, 96
  %v797 = vpop.permute.xlu0 %796
  %v799 = vsel %vm286, %v762, %v791
  %v800 = vsel %vm100, %v799, %v794
  %v801 = vsel %vm293, %v800, %v797
  %v802 = vlaneseq
  %v803 = vshrl.u32 %v802, 7
  %v804 = vsub.s32 0, %v803
  %v805 = vrot.slane %v801, %v804
  %v806 = vadd.f32 %v784, %v805
  %vm807 = vcmp.gt.f32.partialorder %v806, 0.0
  %v808 = vmul.f32 %v806, 0.01
  %v809 = vsel %vm807, %v806, %v808
  %810 = vst [vmem:[#allocation3] sm:$0xff] %v809
  %v811 = vld [vmem:[#allocation3] ss:$2 sm:$0xf]
  %s812 = scalar_lea.vmem [#allocation3], 1
  %v813 = vld [vmem:[%s812] ss:$2 sm:$0xf]
  %v815 = vrot.slane %v813, 7
  %v817 = vsel %vm54, 0.0, %v815
  %vm818 = vcmp.lt.s32.totalorder %v62, 0
  %v819 = vsub.s32 0, %v62
  %v820 = vsel %vm818, %v819, %v62
  %v821 = vshrl.u32 %v820, 1
  %v822 = vand.u32 %v820, 1
  %v823 = vsub.s32 0, %v822
  %v824 = vsel %vm818, %v823, %v822
  %vm825 = vcmp.ne.s32.totalorder %v824, 0
  %vm826 = vcmp.lt.s32.totalorder %v824, 0
  %vm827 = vmand %vm826, %vm825
  %v828 = vadd.s32 %v824, 2
  %v829 = vsel %vm827, %v828, %v824
  %vm830 = vcmp.eq.s32.totalorder %v829, 0
  %v831 = vsel %vm830, 0.0, %v817
  %v832 = vpack.c.bf16 %v831, %v831
  %v833 = vpack.c.bf16 %v811, %v811
  %v834 = vpack.c.bf16 %v813, %v813
  %v835 = vld [vmem:[%s7] sm:$0xf]
  %v836 = vld [vmem:[%s7 + $0x4] sm:$0xf]
  %v837 = vld [vmem:[%s7 + $0x8] sm:$0xf]
  %v838 = vld [vmem:[%s7 + $0xc] sm:$0xf]
  %v839 = vld [vmem:[%s7 + $0x10] sm:$0xf]
  %v840 = vld [vmem:[%s7 + $0x14] sm:$0xf]
  %v841 = vld [vmem:[%s7 + $0x18] sm:$0xf]
  %v842 = vld [vmem:[%s7 + $0x1c] sm:$0xf]
  %v843 = vld [vmem:[%s7 + $0x20] sm:$0xf]
  %v844 = vld [vmem:[%s7 + $0x24] sm:$0xf]
  %v845 = vld [vmem:[%s7 + $0x28] sm:$0xf]
  %v846 = vld [vmem:[%s7 + $0x2c] sm:$0xf]
  %v847 = vld [vmem:[%s7 + $0x30] sm:$0xf]
  %v848 = vld [vmem:[%s7 + $0x34] sm:$0xf]
  %v849 = vld [vmem:[%s7 + $0x38] sm:$0xf]
  %v850 = vld [vmem:[%s7 + $0x3c] sm:$0xf]
  %v851 = vld [vmem:[%s7 + $0x40] sm:$0xf]
  %v852 = vld [vmem:[%s7 + $0x44] sm:$0xf]
  %v853 = vld [vmem:[%s7 + $0x48] sm:$0xf]
  %v854 = vld [vmem:[%s7 + $0x4c] sm:$0xf]
  %v855 = vld [vmem:[%s7 + $0x50] sm:$0xf]
  %v856 = vld [vmem:[%s7 + $0x54] sm:$0xf]
  %v857 = vld [vmem:[%s7 + $0x58] sm:$0xf]
  %v858 = vld [vmem:[%s7 + $0x5c] sm:$0xf]
  %v859 = vld [vmem:[%s7 + $0x60] sm:$0xf]
  %v860 = vld [vmem:[%s7 + $0x64] sm:$0xf]
  %v861 = vld [vmem:[%s7 + $0x68] sm:$0xf]
  %v862 = vld [vmem:[%s7 + $0x6c] sm:$0xf]
  %v863 = vld [vmem:[%s7 + $0x70] sm:$0xf]
  %v864 = vld [vmem:[%s7 + $0x74] sm:$0xf]
  %v865 = vld [vmem:[%s7 + $0x78] sm:$0xf]
  %v866 = vld [vmem:[%s7 + $0x7c] sm:$0xf]
  %v867 = vld [vmem:[%s7 + $0x80] sm:$0xf]
  %v868 = vld [vmem:[%s7 + $0x84] sm:$0xf]
  %v869 = vld [vmem:[%s7 + $0x88] sm:$0xf]
  %v870 = vld [vmem:[%s7 + $0x8c] sm:$0xf]
  %v871 = vld [vmem:[%s7 + $0x90] sm:$0xf]
  %v872 = vld [vmem:[%s7 + $0x94] sm:$0xf]
  %v873 = vld [vmem:[%s7 + $0x98] sm:$0xf]
  %v874 = vld [vmem:[%s7 + $0x9c] sm:$0xf]
  %v875 = vld [vmem:[%s7 + $0xa0] sm:$0xf]
  %v876 = vld [vmem:[%s7 + $0xa4] sm:$0xf]
  %v877 = vld [vmem:[%s7 + $0xa8] sm:$0xf]
  %v878 = vld [vmem:[%s7 + $0xac] sm:$0xf]
  %v879 = vld [vmem:[%s7 + $0xb0] sm:$0xf]
  %v880 = vld [vmem:[%s7 + $0xb4] sm:$0xf]
  %v881 = vld [vmem:[%s7 + $0xb8] sm:$0xf]
  %v882 = vld [vmem:[%s7 + $0xbc] sm:$0xf]
  %v931 = vunpack.c.l.b16 %v835
  %v932 = vunpack.c.l.b16 %v836
  %v933 = vunpack.c.l.b16 %v837
  %v934 = vunpack.c.l.b16 %v838
  %v935 = vunpack.c.l.b16 %v839
  %v936 = vunpack.c.l.b16 %v840
  %v937 = vunpack.c.l.b16 %v841
  %v938 = vunpack.c.l.b16 %v842
  %v939 = vunpack.c.l.b16 %v843
  %v940 = vunpack.c.l.b16 %v844
  %v941 = vunpack.c.l.b16 %v845
  %v942 = vunpack.c.l.b16 %v846
  %v943 = vunpack.c.l.b16 %v847
  %v944 = vunpack.c.l.b16 %v848
  %v945 = vunpack.c.l.b16 %v849
  %v946 = vunpack.c.l.b16 %v850
  %v947 = vunpack.c.l.b16 %v851
  %v948 = vunpack.c.l.b16 %v852
  %v949 = vunpack.c.l.b16 %v853
  %v950 = vunpack.c.l.b16 %v854
  %v951 = vunpack.c.l.b16 %v855
  %v952 = vunpack.c.l.b16 %v856
  %v953 = vunpack.c.l.b16 %v857
  %v954 = vunpack.c.l.b16 %v858
  %v955 = vunpack.c.l.b16 %v859
  %v956 = vunpack.c.l.b16 %v860
  %v957 = vunpack.c.l.b16 %v861
  %v958 = vunpack.c.l.b16 %v862
  %v959 = vunpack.c.l.b16 %v863
  %v960 = vunpack.c.l.b16 %v864
  %v961 = vunpack.c.l.b16 %v865
  %v962 = vunpack.c.l.b16 %v866
  %v963 = vunpack.c.l.b16 %v867
  %v964 = vunpack.c.l.b16 %v868
  %v965 = vunpack.c.l.b16 %v869
  %v966 = vunpack.c.l.b16 %v870
  %v967 = vunpack.c.l.b16 %v871
  %v968 = vunpack.c.l.b16 %v872
  %v969 = vunpack.c.l.b16 %v873
  %v970 = vunpack.c.l.b16 %v874
  %v971 = vunpack.c.l.b16 %v875
  %v972 = vunpack.c.l.b16 %v876
  %v973 = vunpack.c.l.b16 %v877
  %v974 = vunpack.c.l.b16 %v878
  %v975 = vunpack.c.l.b16 %v879
  %v976 = vunpack.c.l.b16 %v880
  %v977 = vunpack.c.l.b16 %v881
  %v978 = vunpack.c.l.b16 %v882
  %v979 = vpack.c.b16 %v932, %v931
  %v980 = vpack.c.b16 %v934, %v933
  %v981 = vpack.c.b16 %v936, %v935
  %v982 = vpack.c.b16 %v938, %v937
  %v983 = vpack.c.b16 %v940, %v939
  %v984 = vpack.c.b16 %v942, %v941
  %v985 = vpack.c.b16 %v944, %v943
  %v986 = vpack.c.b16 %v946, %v945
  %v987 = vpack.c.b16 %v948, %v947
  %v988 = vpack.c.b16 %v950, %v949
  %v989 = vpack.c.b16 %v952, %v951
  %v990 = vpack.c.b16 %v954, %v953
  %v991 = vpack.c.b16 %v956, %v955
  %v992 = vpack.c.b16 %v958, %v957
  %v993 = vpack.c.b16 %v960, %v959
  %v994 = vpack.c.b16 %v962, %v961
  %v995 = vpack.c.b16 %v964, %v963
  %v996 = vpack.c.b16 %v966, %v965
  %v997 = vpack.c.b16 %v968, %v967
  %v998 = vpack.c.b16 %v970, %v969
  %v999 = vpack.c.b16 %v972, %v971
  %v1000 = vpack.c.b16 %v974, %v973
  %v1001 = vpack.c.b16 %v976, %v975
  %v1002 = vpack.c.b16 %v978, %v977
  %1027 = vmatprep.subr.bf16.mxu0 0
  %1028 = vmatpush1.bf16.msra.mxu0 %v979
  %1029 = vmatprep.subr.bf16.mxu0 0
  %1030 = vmatpush1.bf16.msra.mxu0 %v980
  %1031 = vmatprep.subr.bf16.mxu0 0
  %1032 = vmatpush1.bf16.msra.mxu0 %v981
  %1033 = vmatprep.subr.bf16.mxu0 0
  %1034 = vmatpush1.bf16.msra.mxu0 %v982
  %1035 = vmatprep.subr.bf16.mxu0 0
  %1036 = vmatpush1.bf16.msra.mxu0 %v983
  %1037 = vmatprep.subr.bf16.mxu0 0
  %1038 = vmatpush1.bf16.msra.mxu0 %v984
  %1039 = vmatprep.subr.bf16.mxu0 0
  %1040 = vmatpush1.bf16.msra.mxu0 %v985
  %1041 = vmatprep.subr.bf16.mxu0 0
  %1042 = vmatpush1.bf16.msra.mxu0 %v986
  %1043 = vmatprep.subr.bf16.mxu0 0
  %1044 = vmatpush1.bf16.msra.mxu0 %v987
  %1045 = vmatprep.subr.bf16.mxu0 0
  %1046 = vmatpush1.bf16.msra.mxu0 %v988
  %1047 = vmatprep.subr.bf16.mxu0 0
  %1048 = vmatpush1.bf16.msra.mxu0 %v989
  %1049 = vmatprep.subr.bf16.mxu0 0
  %1050 = vmatpush1.bf16.msra.mxu0 %v990
  %1051 = vmatprep.subr.bf16.mxu0 0
  %1052 = vmatpush1.bf16.msra.mxu0 %v991
  %1053 = vmatprep.subr.bf16.mxu0 0
  %1054 = vmatpush1.bf16.msra.mxu0 %v992
  %1055 = vmatprep.subr.bf16.mxu0 0
  %1056 = vmatpush1.bf16.msra.mxu0 %v993
  %1057 = vmatprep.subr.bf16.mxu0 0
  %1058 = vmatpush1.bf16.msra.mxu0 %v994
  %1059 = vmatprep.mubr.bf16.mxu0 %v833
  %1060 = vmatmul.mubr.bf16.gmra.mrb[0].mxu0 %v832
  %v1061 = vpop.f32.mrb[0].mxu0
  %v1062 = vadd.f32 0.0, %v1061
  %v1063 = vpop.f32.mrb[0].mxu0
  %v1064 = vpop.f32.mrb[0].mxu0
  %v1065 = vpop.f32.mrb[0].mxu0
  %1066 = vdwg.mxu0
  %1067 = vmatprep.subr.bf16.mxu0 0
  %1068 = vmatpush1.bf16.msra.mxu0 %v995
  %1069 = vmatprep.subr.bf16.mxu0 0
  %1070 = vmatpush1.bf16.msra.mxu0 %v996
  %1071 = vmatprep.subr.bf16.mxu0 0
  %1072 = vmatpush1.bf16.msra.mxu0 %v997
  %1073 = vmatprep.subr.bf16.mxu0 0
  %1074 = vmatpush1.bf16.msra.mxu0 %v998
  %1075 = vmatprep.subr.bf16.mxu0 0
  %1076 = vmatpush1.bf16.msra.mxu0 %v999
  %1077 = vmatprep.subr.bf16.mxu0 0
  %1078 = vmatpush1.bf16.msra.mxu0 %v1000
  %1079 = vmatprep.subr.bf16.mxu0 0
  %1080 = vmatpush1.bf16.msra.mxu0 %v1001
  %1081 = vmatprep.subr.bf16.mxu0 0
  %1082 = vmatpush1.bf16.msra.mxu0 %v1002
  %1083 = vmatprep.subr.bf16.mxu0 0
  %1084 = vmatpush1.bf16.msra.mxu0 0
  %1085 = vmatprep.subr.bf16.mxu0 0
  %1086 = vmatpush1.bf16.msra.mxu0 0
  %1087 = vmatprep.subr.bf16.mxu0 0
  %1088 = vmatpush1.bf16.msra.mxu0 0
  %1089 = vmatprep.subr.bf16.mxu0 0
  %1090 = vmatpush1.bf16.msra.mxu0 0
  %1091 = vmatprep.subr.bf16.mxu0 0
  %1092 = vmatpush1.bf16.msra.mxu0 0
  %1093 = vmatprep.subr.bf16.mxu0 0
  %1094 = vmatpush1.bf16.msra.mxu0 0
  %1095 = vmatprep.subr.bf16.mxu0 0
  %1096 = vmatpush1.bf16.msra.mxu0 0
  %1097 = vmatprep.subr.bf16.mxu0 0
  %1098 = vmatpush1.bf16.msra.mxu0 0
  %1099 = vmatprep.mubr.bf16.mxu0 0
  %1100 = vmatmul.mubr.bf16.gmra.mrb[0].mxu0 %v834
  %v1101 = vpop.f32.mrb[0].mxu0
  %v1102 = vadd.f32 %v1062, %v1101
  %v1103 = vpop.f32.mrb[0].mxu0
  %v1104 = vpop.f32.mrb[0].mxu0
  %v1105 = vpop.f32.mrb[0].mxu0
  %1106 = vdwg.mxu0
  %vm1107 = vcmask 1043456
  %v1108 = vsel %vm1107, %v1102, 0.0
  %v1109 = vrot.slane %v1108, 4
  %v1110 = vadd.f32 %v1108, %v1109
  %v1111 = vrot.slane %v1110, 2
  %v1112 = vadd.f32 %v1110, %v1111
  %v1113 = vrot.slane %v1112, 1
  %v1114 = vadd.f32 %v1112, %v1113
  %1115 = vrot.lane.b32.xlu0 %v1114, 64
  %v1116 = vpop.permute.xlu0 %1115
  %v1117 = vadd.f32 %v1114, %v1116
  %v1118 = vmul.f32 %v1117, 0.125
  %1120 = vrot.lane.b32.xlu0 %v1118, 64
  %v1121 = vpop.permute.xlu0 %1120
  %v1123 = vsel %vm100, %v1118, %v1121
  %v1124 = vlaneseq
  %v1125 = vshrl.u32 %v1124, 7
  %v1126 = vsub.s32 0, %v1125
  %v1127 = vrot.slane %v1123, %v1126
  %v1128 = vsub.f32 %v1102, %v1127
  %v1129 = vmul.f32 %v1128, %v1128
  %v1130 = vsel %vm1107, %v1129, 0.0
  %v1131 = vrot.slane %v1130, 4
  %v1132 = vadd.f32 %v1130, %v1131
  %v1133 = vrot.slane %v1132, 2
  %v1134 = vadd.f32 %v1132, %v1133
  %v1135 = vrot.slane %v1134, 1
  %v1136 = vadd.f32 %v1134, %v1135
  %1137 = vrot.lane.b32.xlu0 %v1136, 64
  %v1138 = vpop.permute.xlu0 %1137
  %v1139 = vadd.f32 %v1136, %v1138
  %v1140 = vmul.f32 %v1139, 0.125
  %v1141 = vld [vmem:[%s8] sm:$0x1]
  %v1142 = vadd.f32 %v1140, 1e-05
  %v1143 = vrsqrt.pop %v1142
  %v1144 = vmul.f32 %v1141, %v1143
  %v1145 = vld [vmem:[%s9] sm:$0x1]
  %v1146 = vmul.f32 %v1118, %v1144
  %v1147 = vsub.f32 %v1145, %v1146
  %v1149 = vlaneseq
  %v1150 = vshrl.u32 %v1149, 7
  %v1151 = vsub.s32 0, %v1150
  %v1152 = vrot.slane %v1144, %v1151
  %1153 = vrot.lane.b32.xlu0 %v1152, 64
  %v1154 = vpop.permute.xlu0 %1153
  %v1156 = vsel %vm100, %v1144, %v1154
  %v1157 = vlaneseq
  %v1158 = vshrl.u32 %v1157, 7
  %v1159 = vsub.s32 0, %v1158
  %v1160 = vrot.slane %v1156, %v1159
  %v1161 = vmul.f32 %v1102, %v1160
  %v1163 = vlaneseq
  %v1164 = vshrl.u32 %v1163, 7
  %v1165 = vsub.s32 0, %v1164
  %v1166 = vrot.slane %v1147, %v1165
  %1167 = vrot.lane.b32.xlu0 %v1166, 64
  %v1168 = vpop.permute.xlu0 %1167
  %v1170 = vsel %vm100, %v1147, %v1168
  %v1171 = vlaneseq
  %v1172 = vshrl.u32 %v1171, 7
  %v1173 = vsub.s32 0, %v1172
  %v1174 = vrot.slane %v1170, %v1173
  %v1175 = vadd.f32 %v1161, %v1174
  %vm1176 = vcmp.gt.f32.partialorder %v1175, 0.0
  %v1177 = vmul.f32 %v1175, 0.01
  %v1178 = vsel %vm1176, %v1175, %v1177
  %1179 = vst [vmem:[#allocation4] sm:$0xf] %v1178
  %v1180 = vld [vmem:[#allocation4] ss:$2 sm:$0x3]
  %s1181 = scalar_lea.vmem [#allocation4], 1
  %v1182 = vld [vmem:[%s1181] ss:$2 sm:$0x3]
  %v1183 = vpack.c.bf16 %v1180, %v1180
  %v1184 = vpack.c.bf16 %v1182, %v1182
  %v1185 = vld [vmem:[%s10] sm:$0xf]
  %v1186 = vld [vmem:[%s10 + $0x4] sm:$0xf]
  %v1187 = vld [vmem:[%s10 + $0x8] sm:$0xf]
  %v1188 = vld [vmem:[%s10 + $0xc] sm:$0xf]
  %v1189 = vld [vmem:[%s10 + $0x10] sm:$0xf]
  %v1190 = vld [vmem:[%s10 + $0x14] sm:$0xf]
  %v1191 = vld [vmem:[%s10 + $0x18] sm:$0xf]
  %v1192 = vld [vmem:[%s10 + $0x1c] sm:$0xf]
  %v1193 = vld [vmem:[%s10 + $0x20] sm:$0xf]
  %v1194 = vld [vmem:[%s10 + $0x24] sm:$0xf]
  %v1195 = vld [vmem:[%s10 + $0x28] sm:$0xf]
  %v1196 = vld [vmem:[%s10 + $0x2c] sm:$0xf]
  %v1197 = vld [vmem:[%s10 + $0x30] sm:$0xf]
  %v1198 = vld [vmem:[%s10 + $0x34] sm:$0xf]
  %v1199 = vld [vmem:[%s10 + $0x38] sm:$0xf]
  %v1200 = vld [vmem:[%s10 + $0x3c] sm:$0xf]
  %v1201 = vld [vmem:[%s10 + $0x40] sm:$0xf]
  %v1202 = vld [vmem:[%s10 + $0x44] sm:$0xf]
  %v1203 = vld [vmem:[%s10 + $0x48] sm:$0xf]
  %v1204 = vld [vmem:[%s10 + $0x4c] sm:$0xf]
  %v1205 = vld [vmem:[%s10 + $0x50] sm:$0xf]
  %v1206 = vld [vmem:[%s10 + $0x54] sm:$0xf]
  %v1207 = vld [vmem:[%s10 + $0x58] sm:$0xf]
  %v1208 = vld [vmem:[%s10 + $0x5c] sm:$0xf]
  %v1209 = vld [vmem:[%s10 + $0x60] sm:$0xf]
  %v1210 = vld [vmem:[%s10 + $0x64] sm:$0xf]
  %v1211 = vld [vmem:[%s10 + $0x68] sm:$0xf]
  %v1212 = vld [vmem:[%s10 + $0x6c] sm:$0xf]
  %v1213 = vld [vmem:[%s10 + $0x70] sm:$0xf]
  %v1214 = vld [vmem:[%s10 + $0x74] sm:$0xf]
  %v1215 = vld [vmem:[%s10 + $0x78] sm:$0xf]
  %v1216 = vld [vmem:[%s10 + $0x7c] sm:$0xf]
  %v1217 = vld [vmem:[%s11] sm:$0x1]
  %v1219 = vlaneseq
  %v1220 = vshrl.u32 %v1219, 7
  %v1221 = vsub.s32 0, %v1220
  %v1222 = vrot.slane %v1217, %v1221
  %v1256 = vunpack.c.l.b16 %v1185
  %v1257 = vunpack.c.l.b16 %v1186
  %v1258 = vunpack.c.l.b16 %v1187
  %v1259 = vunpack.c.l.b16 %v1188
  %v1260 = vunpack.c.l.b16 %v1189
  %v1261 = vunpack.c.l.b16 %v1190
  %v1262 = vunpack.c.l.b16 %v1191
  %v1263 = vunpack.c.l.b16 %v1192
  %v1264 = vunpack.c.l.b16 %v1193
  %v1265 = vunpack.c.l.b16 %v1194
  %v1266 = vunpack.c.l.b16 %v1195
  %v1267 = vunpack.c.l.b16 %v1196
  %v1268 = vunpack.c.l.b16 %v1197
  %v1269 = vunpack.c.l.b16 %v1198
  %v1270 = vunpack.c.l.b16 %v1199
  %v1271 = vunpack.c.l.b16 %v1200
  %v1272 = vunpack.c.l.b16 %v1201
  %v1273 = vunpack.c.l.b16 %v1202
  %v1274 = vunpack.c.l.b16 %v1203
  %v1275 = vunpack.c.l.b16 %v1204
  %v1276 = vunpack.c.l.b16 %v1205
  %v1277 = vunpack.c.l.b16 %v1206
  %v1278 = vunpack.c.l.b16 %v1207
  %v1279 = vunpack.c.l.b16 %v1208
  %v1280 = vunpack.c.l.b16 %v1209
  %v1281 = vunpack.c.l.b16 %v1210
  %v1282 = vunpack.c.l.b16 %v1211
  %v1283 = vunpack.c.l.b16 %v1212
  %v1284 = vunpack.c.l.b16 %v1213
  %v1285 = vunpack.c.l.b16 %v1214
  %v1286 = vunpack.c.l.b16 %v1215
  %v1287 = vunpack.c.l.b16 %v1216
  %v1288 = vpack.c.b16 %v1257, %v1256
  %v1289 = vpack.c.b16 %v1259, %v1258
  %v1290 = vpack.c.b16 %v1261, %v1260
  %v1291 = vpack.c.b16 %v1263, %v1262
  %v1292 = vpack.c.b16 %v1265, %v1264
  %v1293 = vpack.c.b16 %v1267, %v1266
  %v1294 = vpack.c.b16 %v1269, %v1268
  %v1295 = vpack.c.b16 %v1271, %v1270
  %v1296 = vpack.c.b16 %v1273, %v1272
  %v1297 = vpack.c.b16 %v1275, %v1274
  %v1298 = vpack.c.b16 %v1277, %v1276
  %v1299 = vpack.c.b16 %v1279, %v1278
  %v1300 = vpack.c.b16 %v1281, %v1280
  %v1301 = vpack.c.b16 %v1283, %v1282
  %v1302 = vpack.c.b16 %v1285, %v1284
  %v1303 = vpack.c.b16 %v1287, %v1286
  %1320 = vmatprep.subr.bf16.mxu0 0
  %1321 = vmatpush1.bf16.msra.mxu0 %v1288
  %1322 = vmatprep.subr.bf16.mxu0 0
  %1323 = vmatpush1.bf16.msra.mxu0 %v1289
  %1324 = vmatprep.subr.bf16.mxu0 0
  %1325 = vmatpush1.bf16.msra.mxu0 %v1290
  %1326 = vmatprep.subr.bf16.mxu0 0
  %1327 = vmatpush1.bf16.msra.mxu0 %v1291
  %1328 = vmatprep.subr.bf16.mxu0 0
  %1329 = vmatpush1.bf16.msra.mxu0 %v1292
  %1330 = vmatprep.subr.bf16.mxu0 0
  %1331 = vmatpush1.bf16.msra.mxu0 %v1293
  %1332 = vmatprep.subr.bf16.mxu0 0
  %1333 = vmatpush1.bf16.msra.mxu0 %v1294
  %1334 = vmatprep.subr.bf16.mxu0 0
  %1335 = vmatpush1.bf16.msra.mxu0 %v1295
  %1336 = vmatprep.subr.bf16.mxu0 0
  %1337 = vmatpush1.bf16.msra.mxu0 %v1296
  %1338 = vmatprep.subr.bf16.mxu0 0
  %1339 = vmatpush1.bf16.msra.mxu0 %v1297
  %1340 = vmatprep.subr.bf16.mxu0 0
  %1341 = vmatpush1.bf16.msra.mxu0 %v1298
  %1342 = vmatprep.subr.bf16.mxu0 0
  %1343 = vmatpush1.bf16.msra.mxu0 %v1299
  %1344 = vmatprep.subr.bf16.mxu0 0
  %1345 = vmatpush1.bf16.msra.mxu0 %v1300
  %1346 = vmatprep.subr.bf16.mxu0 0
  %1347 = vmatpush1.bf16.msra.mxu0 %v1301
  %1348 = vmatprep.subr.bf16.mxu0 0
  %1349 = vmatpush1.bf16.msra.mxu0 %v1302
  %1350 = vmatprep.subr.bf16.mxu0 0
  %1351 = vmatpush1.bf16.msra.mxu0 %v1303
  %1352 = vmatprep.mubr.bf16.mxu0 %v1184
  %1353 = vmatmul.mubr.bf16.gmra.mrb[0].mxu0 %v1183
  %v1354 = vpop.f32.mrb[0].mxu0
  %v1355 = vadd.f32 %v1222, %v1354
  %v1356 = vpop.f32.mrb[0].mxu0
  %v1357 = vpop.f32.mrb[0].mxu0
  %v1358 = vpop.f32.mrb[0].mxu0
  %1359 = vdwg.mxu0
  %v1360 = vld [vmem:[%s12] sm:$0x3]
  %v1361 = vmul.f32 %v1355, 0.5
  %v1362 = vmul.f32 %v1361, 1.442695
  %v1363 = vpow.pop %v1362
  %1365 = vrot.lane.b32.xlu0 %v1363, 120
  %v1366 = vpop.permute.xlu0 %1365
  %v1368 = vmul.f32 %v1360, %v1366
  %v1369 = vadd.f32 %v1368, %v1355
  %1371 = vrot.lane.b32.xlu0 %v1355, 8
  %v1372 = vpop.permute.xlu0 %1371
  %vm1374 = vcmask 64512
  %v1375 = vsel %vm1374, %v1369, %v1372
  %vm1376 = vcmask 189440
  %1377 = vst.msk [vmem:[%s13] sm:$0x3] %vm1376, %v1375
  // Predicated region
  $region54: #{encoder_forward.1} parent=0 // pred_check
    _
  $region55: #{encoder_forward.1} parent=0 // pred_check_branch
    %1379 = sbr.rel (0) target = $region57
  $region56: #{encoder_forward.1} parent=0 // pred_region
    _
  $region57: #{encoder_forward.1} parent=0 // pred_fallthru
    _
  // Predicated region
  $region58: #{encoder_forward.1} parent=0 // pred_check
    _
  $region59: #{encoder_forward.1} parent=0 // pred_check_branch
    %1381 = sbr.rel (0) target = $region61
  $region60: #{encoder_forward.1} parent=0 // pred_region
    _
  $region61: #{encoder_forward.1} parent=0 // pred_fallthru
    _

</llo_original>
